<compile_context>
chip_gen: v5e
topology: v5e:2x2
jax: 0.10.0
libtpu: 0.0.40
codegen_flags: <defaults>
</compile_context>

<pallas_src>
import numpy as np

import jax
import jax.numpy as jnp
from jax.experimental import pallas as pl
from jax.experimental.pallas import tpu as pltpu


# ----------------------------------------------------------------------------
# Pallas kernels
# ----------------------------------------------------------------------------
def _conv_tanh_pool_kernel(x_ref, g_ref, b_ref, p_ref, o_ref):
    """Fused 5x5 conv + bias + tanh + 2x2 avg-pool on a stacked-rows slab.

    x_ref: (TB*Hi, Wi*Cin)      input block, channels packed last in each row
    g_ref: (KH, Wi*Cin, Wo*Cout) banded per-row-tap conv matrices
    b_ref: (1, Wo*Cout)          bias tiled over output columns
    p_ref: (Wo*Cout, Wp*Cout)    column 2->1 average-pool matrix (0.5 entries)
    o_ref: (TB*Hi//2, Wp*Cout)   pooled output block (last 2 rows are pad rows)
    """
    kh = g_ref.shape[0]
    wo_c = g_ref.shape[2]
    r_pool = x_ref.shape[0] // 2 - 2          # pooled rows computable in this block

    acc_e = jnp.zeros((r_pool, wo_c), jnp.float32)
    acc_o = jnp.zeros((r_pool, wo_c), jnp.float32)
    for i in range(kh):                        # 5 row taps, fully unrolled
        g_i = g_ref[i]                                     # (Wi*Cin, Wo*Cout)
        x_e = x_ref[pl.ds(i, r_pool, 2), :]                # rows 2r + i
        x_o = x_ref[pl.ds(i + 1, r_pool, 2), :]            # rows 2r + 1 + i
        acc_e = acc_e + jnp.dot(x_e, g_i, preferred_element_type=jnp.float32)
        acc_o = acc_o + jnp.dot(x_o, g_i, preferred_element_type=jnp.float32)

    bias = b_ref[...]
    y = 0.5 * (jnp.tanh(acc_e + bias) + jnp.tanh(acc_o + bias))        # row pool
    pooled = jnp.dot(y, p_ref[...], preferred_element_type=jnp.float32)  # col pool

    o_ref[pl.ds(0, r_pool), :] = pooled.astype(o_ref.dtype)
    # The 2 tail rows of the block (garbage rows of the last image) cannot be
    # computed from in-block data; zero them.  They are never read by any valid
    # output downstream (the next conv's valid rows only touch rows < 14 / < 5).
    o_ref[pl.ds(r_pool, 2), :] = jnp.zeros((2, o_ref.shape[1]), o_ref.dtype)


def _fc_head_kernel(x_ref, w1_ref, b1_ref, w2_ref, b2_ref, w3_ref, b3_ref, o_ref):
    """Fused fc1+tanh -> fc2+tanh -> fc3.

    x_ref : (TB, 8, 80)  pooled conv2 activations; rows 0..4 of each image are
                         valid, packed as (w*16 + c) per row.
    w1_ref: (5, 80, 120) fc1 weight pre-permuted to this layout.
    """
    tb = x_ref.shape[0]
    acc = jnp.zeros((tb, w1_ref.shape[2]), jnp.float32)
    for h in range(w1_ref.shape[0]):                       # 5 valid rows / image
        x_h = x_ref[:, h, :]                               # (TB, 80)
        acc = acc + jnp.dot(x_h, w1_ref[h], preferred_element_type=jnp.float32)
    y = jnp.tanh(acc + b1_ref[...])
    y = jnp.tanh(jnp.dot(y, w2_ref[...], preferred_element_type=jnp.float32)
                 + b2_ref[...])
    y = jnp.dot(y, w3_ref[...], preferred_element_type=jnp.float32) + b3_ref[...]
    o_ref[...] = y.astype(o_ref.dtype)


# ----------------------------------------------------------------------------
# pallas_call wrappers
# ----------------------------------------------------------------------------
def _compiler_params():
    return pltpu.CompilerParams(
        dimension_semantics=("parallel",),       # shard batch blocks over TCs (v7x)
        vmem_limit_bytes=16 * 1024 * 1024,       # safe on v5e/v6e/v7x scoped VMEM
    )


def _pick_tb(batch, cap=8):
    """Images per grid block: keep VMEM/vreg pressure modest, batch-scalable."""
    if batch <= cap:
        return batch
    if batch % cap == 0:
        return cap
    return batch                                  # fallback: single block


def conv_tanh_pool(x2, gmats, bias_p, poolmat, *, img_rows, tb):
    rows, wic = x2.shape
    batch = rows // img_rows
    kh, _, wo_c = gmats.shape
    wp_c = poolmat.shape[1]
    out_img_rows = img_rows // 2
    return pl.pallas_call(
        _conv_tanh_pool_kernel,
        out_shape=jax.ShapeDtypeStruct((batch * out_img_rows, wp_c), jnp.float32),
        grid=(batch // tb,),
        in_specs=[
            pl.BlockSpec((tb * img_rows, wic), lambda i: (i, 0)),
            pl.BlockSpec((kh, gmats.shape[1], wo_c), lambda i: (0, 0, 0)),
            pl.BlockSpec((1, wo_c), lambda i: (0, 0)),
            pl.BlockSpec((wo_c, wp_c), lambda i: (0, 0)),
        ],
        out_specs=pl.BlockSpec((tb * out_img_rows, wp_c), lambda i: (i, 0)),
        compiler_params=_compiler_params(),
    )(x2, gmats, bias_p, poolmat)


def fc_head(p2, w1s, b1, w2t, b2, w3t, b3, *, tb):
    batch = p2.shape[0]
    n_out = w3t.shape[1]
    return pl.pallas_call(
        _fc_head_kernel,
        out_shape=jax.ShapeDtypeStruct((batch, n_out), jnp.float32),
        grid=(batch // tb,),
        in_specs=[
            pl.BlockSpec((tb,) + p2.shape[1:], lambda i: (i, 0, 0)),
            pl.BlockSpec(w1s.shape, lambda i: (0, 0, 0)),
            pl.BlockSpec(b1.shape, lambda i: (0, 0)),
            pl.BlockSpec(w2t.shape, lambda i: (0, 0)),
            pl.BlockSpec(b2.shape, lambda i: (0, 0)),
            pl.BlockSpec(w3t.shape, lambda i: (0, 0)),
            pl.BlockSpec(b3.shape, lambda i: (0, 0)),
        ],
        out_specs=pl.BlockSpec((tb, n_out), lambda i: (i, 0)),
        compiler_params=_compiler_params(),
    )(p2, w1s, b1, w2t, b2, w3t, b3)


# ----------------------------------------------------------------------------
# Parameters (PyTorch layout) and one-time repacking for the kernels
# ----------------------------------------------------------------------------
def init_params(key):
    ks = jax.random.split(key, 10)

    def u(k, shape, fan_in):
        bound = 1.0 / float(np.sqrt(fan_in))
        return jax.random.uniform(k, shape, jnp.float32, -bound, bound)

    return {
        "conv1_w": u(ks[0], (6, 3, 5, 5), 3 * 25),
        "conv1_b": u(ks[1], (6,), 3 * 25),
        "conv2_w": u(ks[2], (16, 6, 5, 5), 6 * 25),
        "conv2_b": u(ks[3], (16,), 6 * 25),
        "fc1_w": u(ks[4], (120, 400), 400),     # PyTorch Linear: (out, in)
        "fc1_b": u(ks[5], (120,), 400),
        "fc2_w": u(ks[6], (84, 120), 120),
        "fc2_b": u(ks[7], (84,), 120),
        "fc3_w": u(ks[8], (3, 84), 84),
        "fc3_b": u(ks[9], (3,), 84),
    }


def _conv_band_matrices(w, w_in, w_out):
    """Fold the KW column taps + Cin->Cout mixing of a KHxKW conv into KH banded
    matrices: G_i[(wo+j)*Cin + ci, wo*Cout + co] = w[co, ci, i, j]."""
    c_out, c_in, kh, kw = w.shape
    g = np.zeros((kh, w_in, c_in, w_out, c_out), np.float32)
    wt = np.transpose(w, (2, 3, 1, 0))          # (kh, kw, cin, cout)
    for i in range(kh):
        for j in range(kw):
            for o in range(w_out):
                g[i, o + j, :, o, :] = wt[i, j]
    return g.reshape(kh, w_in * c_in, w_out * c_out)


def _colpool_matrix(w_out, c):
    p = np.zeros((w_out * c, (w_out // 2) * c), np.float32)
    for w in range(w_out):
        for ch in range(c):
            p[w * c + ch, (w // 2) * c + ch] = 0.5
    return p


def prepare_params(params):
    """One-time (outside jit) repack of PyTorch-layout params into kernel layouts."""
    pt = {k: np.asarray(v, np.float32) for k, v in params.items()}
    # fc1: flatten order in PyTorch is (c, h, w); our activation row is (w*16 + c)
    # per image-row h, so permute the weight once instead of gathering activations.
    w1s = np.transpose(pt["fc1_w"].reshape(120, 16, 5, 5), (2, 3, 1, 0))  # (h,w,c,n)
    prepared = {
        "g1": _conv_band_matrices(pt["conv1_w"], 32, 28),        # (5, 96, 168)
        "b1p": np.tile(pt["conv1_b"], 28).reshape(1, 28 * 6),
        "p1": _colpool_matrix(28, 6),                            # (168, 84)
        "g2": _conv_band_matrices(pt["conv2_w"], 14, 10),        # (5, 84, 160)
        "b2p": np.tile(pt["conv2_b"], 10).reshape(1, 10 * 16),
        "p2": _colpool_matrix(10, 16),                           # (160, 80)
        "w1s": np.ascontiguousarray(w1s.reshape(5, 5 * 16, 120)),
        "fb1": pt["fc1_b"].reshape(1, 120),
        "w2t": np.ascontiguousarray(pt["fc2_w"].T),              # (120, 84)
        "fb2": pt["fc2_b"].reshape(1, 84),
        "w3t": np.ascontiguousarray(pt["fc3_w"].T),              # (84, 3)
        "fb3": pt["fc3_b"].reshape(1, 3),
    }
    return jax.tree_util.tree_map(jnp.asarray, prepared)


# ----------------------------------------------------------------------------
# Forward pass (mirrors GMImagesNet.forward)
# ----------------------------------------------------------------------------
@jax.jit
def gm_images_net_forward(x, prepared):
    """x: (B, 3, 28, 28) NCHW float32 -> logits (B, 3)."""
    batch = x.shape[0]
    tb = _pick_tb(batch)

    # Model boundary only: NCHW -> channels-last stacked-rows slab, with conv1's
    # 'same' padding applied once here.  (B,3,28,28) -> (B*32, 32*3).
    xh = jnp.transpose(x, (0, 2, 3, 1)).astype(jnp.float32)
    xh = jnp.pad(xh, ((0, 0), (2, 2), (2, 2), (0, 0)))
    x2 = xh.reshape(batch * 32, 32 * 3)

    y = conv_tanh_pool(x2, prepared["g1"], prepared["b1p"], prepared["p1"],
                       img_rows=32, tb=tb)                 # (B*16, 14*6)
    y = conv_tanh_pool(y, prepared["g2"], prepared["b2p"], prepared["p2"],
                       img_rows=16, tb=tb)                 # (B*8, 5*16)
    y = y.reshape(batch, 8, 5 * 16)                        # free reshape (per-image view)
    out = fc_head(y, prepared["w1s"], prepared["fb1"], prepared["w2t"],
                  prepared["fb2"], prepared["w3t"], prepared["fb3"], tb=tb)
    return out                                             # (B, 3)


# ----------------------------------------------------------------------------
# Pure-JAX reference (for on-device correctness check)
# ----------------------------------------------------------------------------
@jax.jit
def reference_forward(x, params):
    y = jax.lax.conv_general_dilated(
        x, params["conv1_w"], (1, 1), ((2, 2), (2, 2)),
        dimension_numbers=("NCHW", "OIHW", "NCHW"))
    y = jnp.tanh(y + params["conv1_b"][None, :, None, None])
    y = jax.lax.reduce_window(y, 0.0, jax.lax.add,
                              (1, 1, 2, 2), (1, 1, 2, 2), "VALID") * 0.25
    y = jax.lax.conv_general_dilated(
        y, params["conv2_w"], (1, 1), ((0, 0), (0, 0)),
        dimension_numbers=("NCHW", "OIHW", "NCHW"))
    y = jnp.tanh(y + params["conv2_b"][None, :, None, None])
    y = jax.lax.reduce_window(y, 0.0, jax.lax.add,
                              (1, 1, 2, 2), (1, 1, 2, 2), "VALID") * 0.25
    y = y.reshape(x.shape[0], -1)
    y = jnp.tanh(y @ params["fc1_w"].T + params["fc1_b"])
    y = jnp.tanh(y @ params["fc2_w"].T + params["fc2_b"])
    return y @ params["fc3_w"].T + params["fc3_b"]


if __name__ == "__main__":
    key = jax.random.PRNGKey(0)
    k_x, k_p = jax.random.split(key)
    # Input spatial size 28x28 is dictated by fc1 expecting 16*5*5 features.
    x = jax.random.normal(k_x, (2, 3, 28, 28), dtype=jnp.float32)
    params = init_params(k_p)
    prepared = prepare_params(params)

    out = jax.block_until_ready(gm_images_net_forward(x, prepared))
    assert out.shape == (2, 3), out.shape

    ref = jax.block_until_ready(reference_forward(x, params))
    err = float(jnp.max(jnp.abs(out - ref)))
    assert err < 5e-2, f"max |pallas - reference| too large: {err}"
    print("KERNEL_OK")
</pallas_src>

<mosaic_0001>
module attributes {stable_mosaic.version = 11 : i64} {
  func.func @_conv_tanh_pool_kernel(%arg0: i32, %arg1: memref<64x96xf32, #tpu.memory_space<vmem>>, %arg2: memref<5x96x168xf32, #tpu.memory_space<vmem>>, %arg3: memref<1x168xf32, #tpu.memory_space<vmem>>, %arg4: memref<168x84xf32, #tpu.memory_space<vmem>>, %arg5: memref<32x84xf32, #tpu.memory_space<vmem>>) attributes {dimension_semantics = [#tpu.dimension_semantics<parallel>], iteration_bounds = array<i64: 1>, scalar_prefetch = 0 : i64, scratch_operands = 0 : i64, tpu.core_type = #tpu.core_type<tc>, window_params = [{transform_indices = @transform_0, window_bounds = array<i64: 64, 96>}, {pipeline_mode = #tpu.pipeline_mode<synchronous>, transform_indices = @transform_1, window_bounds = array<i64: 5, 96, 168>}, {pipeline_mode = #tpu.pipeline_mode<synchronous>, transform_indices = @transform_2, window_bounds = array<i64: 1, 168>}, {pipeline_mode = #tpu.pipeline_mode<synchronous>, transform_indices = @transform_3, window_bounds = array<i64: 168, 84>}, {transform_indices = @transform_4, window_bounds = array<i64: 32, 84>}]} {
    %cst = arith.constant 0.000000e+00 : f32
    %0 = vector.broadcast %cst : f32 to vector<30x168xf32>
    %cst_0 = arith.constant 0.000000e+00 : f32
    %1 = vector.broadcast %cst_0 : f32 to vector<30x168xf32>
    %c0 = arith.constant 0 : index
    %c0_1 = arith.constant 0 : index
    %c0_2 = arith.constant 0 : index
    %2 = vector.load %arg2[%c0, %c0_1, %c0_2] : memref<5x96x168xf32, #tpu.memory_space<vmem>>, vector<1x96x168xf32>
    %3 = vector.shape_cast %2 : vector<1x96x168xf32> to vector<96x168xf32>
    %c0_3 = arith.constant 0 : index
    %c0_4 = arith.constant 0 : index
    %4 = tpu.strided_load %arg1[%c0_3, %c0_4] {strides = array<i32: 2, 1>} : memref<64x96xf32, #tpu.memory_space<vmem>>, vector<30x96xf32>
    %c1 = arith.constant 1 : index
    %c0_5 = arith.constant 0 : index
    %5 = tpu.strided_load %arg1[%c1, %c0_5] {strides = array<i32: 2, 1>} : memref<64x96xf32, #tpu.memory_space<vmem>>, vector<30x96xf32>
    %cst_6 = arith.constant dense<0.000000e+00> : vector<30x168xf32>
    %6 = tpu.matmul %4, %3, %cst_6 {dimension_numbers = #tpu.dot_dimension_numbers<[1], [0], [0], [1], [0, 0, 1, 1], [], []>} : vector<30x96xf32>, vector<96x168xf32>, vector<30x168xf32> -> vector<30x168xf32>
    %7 = arith.addf %0, %6 : vector<30x168xf32>
    %cst_7 = arith.constant dense<0.000000e+00> : vector<30x168xf32>
    %8 = tpu.matmul %5, %3, %cst_7 {dimension_numbers = #tpu.dot_dimension_numbers<[1], [0], [0], [1], [0, 0, 1, 1], [], []>} : vector<30x96xf32>, vector<96x168xf32>, vector<30x168xf32> -> vector<30x168xf32>
    %9 = arith.addf %1, %8 : vector<30x168xf32>
    %c1_8 = arith.constant 1 : index
    %c0_9 = arith.constant 0 : index
    %c0_10 = arith.constant 0 : index
    %10 = vector.load %arg2[%c1_8, %c0_9, %c0_10] : memref<5x96x168xf32, #tpu.memory_space<vmem>>, vector<1x96x168xf32>
    %11 = vector.shape_cast %10 : vector<1x96x168xf32> to vector<96x168xf32>
    %c1_11 = arith.constant 1 : index
    %c0_12 = arith.constant 0 : index
    %12 = tpu.strided_load %arg1[%c1_11, %c0_12] {strides = array<i32: 2, 1>} : memref<64x96xf32, #tpu.memory_space<vmem>>, vector<30x96xf32>
    %c2 = arith.constant 2 : index
    %c0_13 = arith.constant 0 : index
    %13 = tpu.strided_load %arg1[%c2, %c0_13] {strides = array<i32: 2, 1>} : memref<64x96xf32, #tpu.memory_space<vmem>>, vector<30x96xf32>
    %cst_14 = arith.constant dense<0.000000e+00> : vector<30x168xf32>
    %14 = tpu.matmul %12, %11, %cst_14 {dimension_numbers = #tpu.dot_dimension_numbers<[1], [0], [0], [1], [0, 0, 1, 1], [], []>} : vector<30x96xf32>, vector<96x168xf32>, vector<30x168xf32> -> vector<30x168xf32>
    %15 = arith.addf %7, %14 : vector<30x168xf32>
    %cst_15 = arith.constant dense<0.000000e+00> : vector<30x168xf32>
    %16 = tpu.matmul %13, %11, %cst_15 {dimension_numbers = #tpu.dot_dimension_numbers<[1], [0], [0], [1], [0, 0, 1, 1], [], []>} : vector<30x96xf32>, vector<96x168xf32>, vector<30x168xf32> -> vector<30x168xf32>
    %17 = arith.addf %9, %16 : vector<30x168xf32>
    %c2_16 = arith.constant 2 : index
    %c0_17 = arith.constant 0 : index
    %c0_18 = arith.constant 0 : index
    %18 = vector.load %arg2[%c2_16, %c0_17, %c0_18] : memref<5x96x168xf32, #tpu.memory_space<vmem>>, vector<1x96x168xf32>
    %19 = vector.shape_cast %18 : vector<1x96x168xf32> to vector<96x168xf32>
    %c2_19 = arith.constant 2 : index
    %c0_20 = arith.constant 0 : index
    %20 = tpu.strided_load %arg1[%c2_19, %c0_20] {strides = array<i32: 2, 1>} : memref<64x96xf32, #tpu.memory_space<vmem>>, vector<30x96xf32>
    %c3 = arith.constant 3 : index
    %c0_21 = arith.constant 0 : index
    %21 = tpu.strided_load %arg1[%c3, %c0_21] {strides = array<i32: 2, 1>} : memref<64x96xf32, #tpu.memory_space<vmem>>, vector<30x96xf32>
    %cst_22 = arith.constant dense<0.000000e+00> : vector<30x168xf32>
    %22 = tpu.matmul %20, %19, %cst_22 {dimension_numbers = #tpu.dot_dimension_numbers<[1], [0], [0], [1], [0, 0, 1, 1], [], []>} : vector<30x96xf32>, vector<96x168xf32>, vector<30x168xf32> -> vector<30x168xf32>
    %23 = arith.addf %15, %22 : vector<30x168xf32>
    %cst_23 = arith.constant dense<0.000000e+00> : vector<30x168xf32>
    %24 = tpu.matmul %21, %19, %cst_23 {dimension_numbers = #tpu.dot_dimension_numbers<[1], [0], [0], [1], [0, 0, 1, 1], [], []>} : vector<30x96xf32>, vector<96x168xf32>, vector<30x168xf32> -> vector<30x168xf32>
    %25 = arith.addf %17, %24 : vector<30x168xf32>
    %c3_24 = arith.constant 3 : index
    %c0_25 = arith.constant 0 : index
    %c0_26 = arith.constant 0 : index
    %26 = vector.load %arg2[%c3_24, %c0_25, %c0_26] : memref<5x96x168xf32, #tpu.memory_space<vmem>>, vector<1x96x168xf32>
    %27 = vector.shape_cast %26 : vector<1x96x168xf32> to vector<96x168xf32>
    %c3_27 = arith.constant 3 : index
    %c0_28 = arith.constant 0 : index
    %28 = tpu.strided_load %arg1[%c3_27, %c0_28] {strides = array<i32: 2, 1>} : memref<64x96xf32, #tpu.memory_space<vmem>>, vector<30x96xf32>
    %c4 = arith.constant 4 : index
    %c0_29 = arith.constant 0 : index
    %29 = tpu.strided_load %arg1[%c4, %c0_29] {strides = array<i32: 2, 1>} : memref<64x96xf32, #tpu.memory_space<vmem>>, vector<30x96xf32>
    %cst_30 = arith.constant dense<0.000000e+00> : vector<30x168xf32>
    %30 = tpu.matmul %28, %27, %cst_30 {dimension_numbers = #tpu.dot_dimension_numbers<[1], [0], [0], [1], [0, 0, 1, 1], [], []>} : vector<30x96xf32>, vector<96x168xf32>, vector<30x168xf32> -> vector<30x168xf32>
    %31 = arith.addf %23, %30 : vector<30x168xf32>
    %cst_31 = arith.constant dense<0.000000e+00> : vector<30x168xf32>
    %32 = tpu.matmul %29, %27, %cst_31 {dimension_numbers = #tpu.dot_dimension_numbers<[1], [0], [0], [1], [0, 0, 1, 1], [], []>} : vector<30x96xf32>, vector<96x168xf32>, vector<30x168xf32> -> vector<30x168xf32>
    %33 = arith.addf %25, %32 : vector<30x168xf32>
    %c4_32 = arith.constant 4 : index
    %c0_33 = arith.constant 0 : index
    %c0_34 = arith.constant 0 : index
    %34 = vector.load %arg2[%c4_32, %c0_33, %c0_34] : memref<5x96x168xf32, #tpu.memory_space<vmem>>, vector<1x96x168xf32>
    %35 = vector.shape_cast %34 : vector<1x96x168xf32> to vector<96x168xf32>
    %c4_35 = arith.constant 4 : index
    %c0_36 = arith.constant 0 : index
    %36 = tpu.strided_load %arg1[%c4_35, %c0_36] {strides = array<i32: 2, 1>} : memref<64x96xf32, #tpu.memory_space<vmem>>, vector<30x96xf32>
    %c5 = arith.constant 5 : index
    %c0_37 = arith.constant 0 : index
    %37 = tpu.strided_load %arg1[%c5, %c0_37] {strides = array<i32: 2, 1>} : memref<64x96xf32, #tpu.memory_space<vmem>>, vector<30x96xf32>
    %cst_38 = arith.constant dense<0.000000e+00> : vector<30x168xf32>
    %38 = tpu.matmul %36, %35, %cst_38 {dimension_numbers = #tpu.dot_dimension_numbers<[1], [0], [0], [1], [0, 0, 1, 1], [], []>} : vector<30x96xf32>, vector<96x168xf32>, vector<30x168xf32> -> vector<30x168xf32>
    %39 = arith.addf %31, %38 : vector<30x168xf32>
    %cst_39 = arith.constant dense<0.000000e+00> : vector<30x168xf32>
    %40 = tpu.matmul %37, %35, %cst_39 {dimension_numbers = #tpu.dot_dimension_numbers<[1], [0], [0], [1], [0, 0, 1, 1], [], []>} : vector<30x96xf32>, vector<96x168xf32>, vector<30x168xf32> -> vector<30x168xf32>
    %41 = arith.addf %33, %40 : vector<30x168xf32>
    %c0_40 = arith.constant 0 : index
    %c0_41 = arith.constant 0 : index
    %42 = vector.load %arg3[%c0_40, %c0_41] : memref<1x168xf32, #tpu.memory_space<vmem>>, vector<1x168xf32>
    %43 = vector.broadcast %42 : vector<1x168xf32> to vector<30x168xf32>
    %44 = arith.addf %39, %43 : vector<30x168xf32>
    %45 = math.tanh %44 : vector<30x168xf32>
    %46 = vector.broadcast %42 : vector<1x168xf32> to vector<30x168xf32>
    %47 = arith.addf %41, %46 : vector<30x168xf32>
    %48 = math.tanh %47 : vector<30x168xf32>
    %49 = arith.addf %45, %48 : vector<30x168xf32>
    %cst_42 = arith.constant 5.000000e-01 : f32
    %50 = vector.broadcast %cst_42 : f32 to vector<30x168xf32>
    %51 = arith.mulf %50, %49 : vector<30x168xf32>
    %c0_43 = arith.constant 0 : index
    %c0_44 = arith.constant 0 : index
    %52 = vector.load %arg4[%c0_43, %c0_44] : memref<168x84xf32, #tpu.memory_space<vmem>>, vector<168x84xf32>
    %cst_45 = arith.constant dense<0.000000e+00> : vector<30x84xf32>
    %53 = tpu.matmul %51, %52, %cst_45 {dimension_numbers = #tpu.dot_dimension_numbers<[1], [0], [0], [1], [0, 0, 1, 1], [], []>} : vector<30x168xf32>, vector<168x84xf32>, vector<30x84xf32> -> vector<30x84xf32>
    %c0_46 = arith.constant 0 : index
    %c0_47 = arith.constant 0 : index
    %54 = vector.load %arg5[%c0_46, %c0_47] : memref<32x84xf32, #tpu.memory_space<vmem>>, vector<30x84xf32>
    tpu.vector_store %arg5[%c0_46, %c0_47], %53 {strides = array<i32>} : memref<32x84xf32, #tpu.memory_space<vmem>>, vector<30x84xf32>,
    %cst_48 = arith.constant 0.000000e+00 : f32
    %55 = vector.broadcast %cst_48 : f32 to vector<2x84xf32>
    %c30 = arith.constant 30 : index
    %c0_49 = arith.constant 0 : index
    %56 = vector.load %arg5[%c30, %c0_49] : memref<32x84xf32, #tpu.memory_space<vmem>>, vector<2x84xf32>
    tpu.vector_store %arg5[%c30, %c0_49], %55 {strides = array<i32>} : memref<32x84xf32, #tpu.memory_space<vmem>>, vector<2x84xf32>,
    return
  }
  func.func @transform_0(%arg0: i32) -> (i32, i32) {
    %c0_i32 = arith.constant 0 : i32
    %c0_i32_0 = arith.constant 0 : i32
    return %arg0, %c0_i32 : i32, i32
  }
  func.func @transform_1(%arg0: i32) -> (i32, i32, i32) {
    %c0_i32 = arith.constant 0 : i32
    %c0_i32_0 = arith.constant 0 : i32
    %c0_i32_1 = arith.constant 0 : i32
    %c0_i32_2 = arith.constant 0 : i32
    return %c0_i32, %c0_i32_0, %c0_i32_1 : i32, i32, i32
  }
  func.func @transform_2(%arg0: i32) -> (i32, i32) {
    %c0_i32 = arith.constant 0 : i32
    %c0_i32_0 = arith.constant 0 : i32
    %c0_i32_1 = arith.constant 0 : i32
    return %c0_i32, %c0_i32_0 : i32, i32
  }
  func.func @transform_3(%arg0: i32) -> (i32, i32) {
    %c0_i32 = arith.constant 0 : i32
    %c0_i32_0 = arith.constant 0 : i32
    %c0_i32_1 = arith.constant 0 : i32
    return %c0_i32, %c0_i32_0 : i32, i32
  }
  func.func @transform_4(%arg0: i32) -> (i32, i32) {
    %c0_i32 = arith.constant 0 : i32
    %c0_i32_0 = arith.constant 0 : i32
    return %arg0, %c0_i32 : i32, i32
  }
}

module attributes {stable_mosaic.version = 11 : i64} {
  func.func @_conv_tanh_pool_kernel(%arg0: i32, %arg1: memref<32x84xf32, #tpu.memory_space<vmem>>, %arg2: memref<5x84x160xf32, #tpu.memory_space<vmem>>, %arg3: memref<1x160xf32, #tpu.memory_space<vmem>>, %arg4: memref<160x80xf32, #tpu.memory_space<vmem>>, %arg5: memref<16x80xf32, #tpu.memory_space<vmem>>) attributes {dimension_semantics = [#tpu.dimension_semantics<parallel>], iteration_bounds = array<i64: 1>, scalar_prefetch = 0 : i64, scratch_operands = 0 : i64, tpu.core_type = #tpu.core_type<tc>, window_params = [{transform_indices = @transform_0, window_bounds = array<i64: 32, 84>}, {pipeline_mode = #tpu.pipeline_mode<synchronous>, transform_indices = @transform_1, window_bounds = array<i64: 5, 84, 160>}, {pipeline_mode = #tpu.pipeline_mode<synchronous>, transform_indices = @transform_2, window_bounds = array<i64: 1, 160>}, {pipeline_mode = #tpu.pipeline_mode<synchronous>, transform_indices = @transform_3, window_bounds = array<i64: 160, 80>}, {transform_indices = @transform_4, window_bounds = array<i64: 16, 80>}]} {
    %cst = arith.constant 0.000000e+00 : f32
    %0 = vector.broadcast %cst : f32 to vector<14x160xf32>
    %cst_0 = arith.constant 0.000000e+00 : f32
    %1 = vector.broadcast %cst_0 : f32 to vector<14x160xf32>
    %c0 = arith.constant 0 : index
    %c0_1 = arith.constant 0 : index
    %c0_2 = arith.constant 0 : index
    %2 = vector.load %arg2[%c0, %c0_1, %c0_2] : memref<5x84x160xf32, #tpu.memory_space<vmem>>, vector<1x84x160xf32>
    %3 = vector.shape_cast %2 : vector<1x84x160xf32> to vector<84x160xf32>
    %c0_3 = arith.constant 0 : index
    %c0_4 = arith.constant 0 : index
    %4 = tpu.strided_load %arg1[%c0_3, %c0_4] {strides = array<i32: 2, 1>} : memref<32x84xf32, #tpu.memory_space<vmem>>, vector<14x84xf32>
    %c1 = arith.constant 1 : index
    %c0_5 = arith.constant 0 : index
    %5 = tpu.strided_load %arg1[%c1, %c0_5] {strides = array<i32: 2, 1>} : memref<32x84xf32, #tpu.memory_space<vmem>>, vector<14x84xf32>
    %cst_6 = arith.constant dense<0.000000e+00> : vector<14x160xf32>
    %6 = tpu.matmul %4, %3, %cst_6 {dimension_numbers = #tpu.dot_dimension_numbers<[1], [0], [0], [1], [0, 0, 1, 1], [], []>} : vector<14x84xf32>, vector<84x160xf32>, vector<14x160xf32> -> vector<14x160xf32>
    %7 = arith.addf %0, %6 : vector<14x160xf32>
    %cst_7 = arith.constant dense<0.000000e+00> : vector<14x160xf32>
    %8 = tpu.matmul %5, %3, %cst_7 {dimension_numbers = #tpu.dot_dimension_numbers<[1], [0], [0], [1], [0, 0, 1, 1], [], []>} : vector<14x84xf32>, vector<84x160xf32>, vector<14x160xf32> -> vector<14x160xf32>
    %9 = arith.addf %1, %8 : vector<14x160xf32>
    %c1_8 = arith.constant 1 : index
    %c0_9 = arith.constant 0 : index
    %c0_10 = arith.constant 0 : index
    %10 = vector.load %arg2[%c1_8, %c0_9, %c0_10] : memref<5x84x160xf32, #tpu.memory_space<vmem>>, vector<1x84x160xf32>
    %11 = vector.shape_cast %10 : vector<1x84x160xf32> to vector<84x160xf32>
    %c1_11 = arith.constant 1 : index
    %c0_12 = arith.constant 0 : index
    %12 = tpu.strided_load %arg1[%c1_11, %c0_12] {strides = array<i32: 2, 1>} : memref<32x84xf32, #tpu.memory_space<vmem>>, vector<14x84xf32>
    %c2 = arith.constant 2 : index
    %c0_13 = arith.constant 0 : index
    %13 = tpu.strided_load %arg1[%c2, %c0_13] {strides = array<i32: 2, 1>} : memref<32x84xf32, #tpu.memory_space<vmem>>, vector<14x84xf32>
    %cst_14 = arith.constant dense<0.000000e+00> : vector<14x160xf32>
    %14 = tpu.matmul %12, %11, %cst_14 {dimension_numbers = #tpu.dot_dimension_numbers<[1], [0], [0], [1], [0, 0, 1, 1], [], []>} : vector<14x84xf32>, vector<84x160xf32>, vector<14x160xf32> -> vector<14x160xf32>
    %15 = arith.addf %7, %14 : vector<14x160xf32>
    %cst_15 = arith.constant dense<0.000000e+00> : vector<14x160xf32>
    %16 = tpu.matmul %13, %11, %cst_15 {dimension_numbers = #tpu.dot_dimension_numbers<[1], [0], [0], [1], [0, 0, 1, 1], [], []>} : vector<14x84xf32>, vector<84x160xf32>, vector<14x160xf32> -> vector<14x160xf32>
    %17 = arith.addf %9, %16 : vector<14x160xf32>
    %c2_16 = arith.constant 2 : index
    %c0_17 = arith.constant 0 : index
    %c0_18 = arith.constant 0 : index
    %18 = vector.load %arg2[%c2_16, %c0_17, %c0_18] : memref<5x84x160xf32, #tpu.memory_space<vmem>>, vector<1x84x160xf32>
    %19 = vector.shape_cast %18 : vector<1x84x160xf32> to vector<84x160xf32>
    %c2_19 = arith.constant 2 : index
    %c0_20 = arith.constant 0 : index
    %20 = tpu.strided_load %arg1[%c2_19, %c0_20] {strides = array<i32: 2, 1>} : memref<32x84xf32, #tpu.memory_space<vmem>>, vector<14x84xf32>
    %c3 = arith.constant 3 : index
    %c0_21 = arith.constant 0 : index
    %21 = tpu.strided_load %arg1[%c3, %c0_21] {strides = array<i32: 2, 1>} : memref<32x84xf32, #tpu.memory_space<vmem>>, vector<14x84xf32>
    %cst_22 = arith.constant dense<0.000000e+00> : vector<14x160xf32>
    %22 = tpu.matmul %20, %19, %cst_22 {dimension_numbers = #tpu.dot_dimension_numbers<[1], [0], [0], [1], [0, 0, 1, 1], [], []>} : vector<14x84xf32>, vector<84x160xf32>, vector<14x160xf32> -> vector<14x160xf32>
    %23 = arith.addf %15, %22 : vector<14x160xf32>
    %cst_23 = arith.constant dense<0.000000e+00> : vector<14x160xf32>
    %24 = tpu.matmul %21, %19, %cst_23 {dimension_numbers = #tpu.dot_dimension_numbers<[1], [0], [0], [1], [0, 0, 1, 1], [], []>} : vector<14x84xf32>, vector<84x160xf32>, vector<14x160xf32> -> vector<14x160xf32>
    %25 = arith.addf %17, %24 : vector<14x160xf32>
    %c3_24 = arith.constant 3 : index
    %c0_25 = arith.constant 0 : index
    %c0_26 = arith.constant 0 : index
    %26 = vector.load %arg2[%c3_24, %c0_25, %c0_26] : memref<5x84x160xf32, #tpu.memory_space<vmem>>, vector<1x84x160xf32>
    %27 = vector.shape_cast %26 : vector<1x84x160xf32> to vector<84x160xf32>
    %c3_27 = arith.constant 3 : index
    %c0_28 = arith.constant 0 : index
    %28 = tpu.strided_load %arg1[%c3_27, %c0_28] {strides = array<i32: 2, 1>} : memref<32x84xf32, #tpu.memory_space<vmem>>, vector<14x84xf32>
    %c4 = arith.constant 4 : index
    %c0_29 = arith.constant 0 : index
    %29 = tpu.strided_load %arg1[%c4, %c0_29] {strides = array<i32: 2, 1>} : memref<32x84xf32, #tpu.memory_space<vmem>>, vector<14x84xf32>
    %cst_30 = arith.constant dense<0.000000e+00> : vector<14x160xf32>
    %30 = tpu.matmul %28, %27, %cst_30 {dimension_numbers = #tpu.dot_dimension_numbers<[1], [0], [0], [1], [0, 0, 1, 1], [], []>} : vector<14x84xf32>, vector<84x160xf32>, vector<14x160xf32> -> vector<14x160xf32>
    %31 = arith.addf %23, %30 : vector<14x160xf32>
    %cst_31 = arith.constant dense<0.000000e+00> : vector<14x160xf32>
    %32 = tpu.matmul %29, %27, %cst_31 {dimension_numbers = #tpu.dot_dimension_numbers<[1], [0], [0], [1], [0, 0, 1, 1], [], []>} : vector<14x84xf32>, vector<84x160xf32>, vector<14x160xf32> -> vector<14x160xf32>
    %33 = arith.addf %25, %32 : vector<14x160xf32>
    %c4_32 = arith.constant 4 : index
    %c0_33 = arith.constant 0 : index
    %c0_34 = arith.constant 0 : index
    %34 = vector.load %arg2[%c4_32, %c0_33, %c0_34] : memref<5x84x160xf32, #tpu.memory_space<vmem>>, vector<1x84x160xf32>
    %35 = vector.shape_cast %34 : vector<1x84x160xf32> to vector<84x160xf32>
    %c4_35 = arith.constant 4 : index
    %c0_36 = arith.constant 0 : index
    %36 = tpu.strided_load %arg1[%c4_35, %c0_36] {strides = array<i32: 2, 1>} : memref<32x84xf32, #tpu.memory_space<vmem>>, vector<14x84xf32>
    %c5 = arith.constant 5 : index
    %c0_37 = arith.constant 0 : index
    %37 = tpu.strided_load %arg1[%c5, %c0_37] {strides = array<i32: 2, 1>} : memref<32x84xf32, #tpu.memory_space<vmem>>, vector<14x84xf32>
    %cst_38 = arith.constant dense<0.000000e+00> : vector<14x160xf32>
    %38 = tpu.matmul %36, %35, %cst_38 {dimension_numbers = #tpu.dot_dimension_numbers<[1], [0], [0], [1], [0, 0, 1, 1], [], []>} : vector<14x84xf32>, vector<84x160xf32>, vector<14x160xf32> -> vector<14x160xf32>
    %39 = arith.addf %31, %38 : vector<14x160xf32>
    %cst_39 = arith.constant dense<0.000000e+00> : vector<14x160xf32>
    %40 = tpu.matmul %37, %35, %cst_39 {dimension_numbers = #tpu.dot_dimension_numbers<[1], [0], [0], [1], [0, 0, 1, 1], [], []>} : vector<14x84xf32>, vector<84x160xf32>, vector<14x160xf32> -> vector<14x160xf32>
    %41 = arith.addf %33, %40 : vector<14x160xf32>
    %c0_40 = arith.constant 0 : index
    %c0_41 = arith.constant 0 : index
    %42 = vector.load %arg3[%c0_40, %c0_41] : memref<1x160xf32, #tpu.memory_space<vmem>>, vector<1x160xf32>
    %43 = vector.broadcast %42 : vector<1x160xf32> to vector<14x160xf32>
    %44 = arith.addf %39, %43 : vector<14x160xf32>
    %45 = math.tanh %44 : vector<14x160xf32>
    %46 = vector.broadcast %42 : vector<1x160xf32> to vector<14x160xf32>
    %47 = arith.addf %41, %46 : vector<14x160xf32>
    %48 = math.tanh %47 : vector<14x160xf32>
    %49 = arith.addf %45, %48 : vector<14x160xf32>
    %cst_42 = arith.constant 5.000000e-01 : f32
    %50 = vector.broadcast %cst_42 : f32 to vector<14x160xf32>
    %51 = arith.mulf %50, %49 : vector<14x160xf32>
    %c0_43 = arith.constant 0 : index
    %c0_44 = arith.constant 0 : index
    %52 = vector.load %arg4[%c0_43, %c0_44] : memref<160x80xf32, #tpu.memory_space<vmem>>, vector<160x80xf32>
    %cst_45 = arith.constant dense<0.000000e+00> : vector<14x80xf32>
    %53 = tpu.matmul %51, %52, %cst_45 {dimension_numbers = #tpu.dot_dimension_numbers<[1], [0], [0], [1], [0, 0, 1, 1], [], []>} : vector<14x160xf32>, vector<160x80xf32>, vector<14x80xf32> -> vector<14x80xf32>
    %c0_46 = arith.constant 0 : index
    %c0_47 = arith.constant 0 : index
    %54 = vector.load %arg5[%c0_46, %c0_47] : memref<16x80xf32, #tpu.memory_space<vmem>>, vector<14x80xf32>
    tpu.vector_store %arg5[%c0_46, %c0_47], %53 {strides = array<i32>} : memref<16x80xf32, #tpu.memory_space<vmem>>, vector<14x80xf32>,
    %cst_48 = arith.constant 0.000000e+00 : f32
    %55 = vector.broadcast %cst_48 : f32 to vector<2x80xf32>
    %c14 = arith.constant 14 : index
    %c0_49 = arith.constant 0 : index
    %56 = vector.load %arg5[%c14, %c0_49] : memref<16x80xf32, #tpu.memory_space<vmem>>, vector<2x80xf32>
    tpu.vector_store %arg5[%c14, %c0_49], %55 {strides = array<i32>} : memref<16x80xf32, #tpu.memory_space<vmem>>, vector<2x80xf32>,
    return
  }
  func.func @transform_0(%arg0: i32) -> (i32, i32) {
    %c0_i32 = arith.constant 0 : i32
    %c0_i32_0 = arith.constant 0 : i32
    return %arg0, %c0_i32 : i32, i32
  }
  func.func @transform_1(%arg0: i32) -> (i32, i32, i32) {
    %c0_i32 = arith.constant 0 : i32
    %c0_i32_0 = arith.constant 0 : i32
    %c0_i32_1 = arith.constant 0 : i32
    %c0_i32_2 = arith.constant 0 : i32
    return %c0_i32, %c0_i32_0, %c0_i32_1 : i32, i32, i32
  }
  func.func @transform_2(%arg0: i32) -> (i32, i32) {
    %c0_i32 = arith.constant 0 : i32
    %c0_i32_0 = arith.constant 0 : i32
    %c0_i32_1 = arith.constant 0 : i32
    return %c0_i32, %c0_i32_0 : i32, i32
  }
  func.func @transform_3(%arg0: i32) -> (i32, i32) {
    %c0_i32 = arith.constant 0 : i32
    %c0_i32_0 = arith.constant 0 : i32
    %c0_i32_1 = arith.constant 0 : i32
    return %c0_i32, %c0_i32_0 : i32, i32
  }
  func.func @transform_4(%arg0: i32) -> (i32, i32) {
    %c0_i32 = arith.constant 0 : i32
    %c0_i32_0 = arith.constant 0 : i32
    return %arg0, %c0_i32 : i32, i32
  }
}

module attributes {stable_mosaic.version = 11 : i64} {
  func.func @_fc_head_kernel(%arg0: i32, %arg1: memref<2x8x80xf32, #tpu.memory_space<vmem>>, %arg2: memref<5x80x120xf32, #tpu.memory_space<vmem>>, %arg3: memref<1x120xf32, #tpu.memory_space<vmem>>, %arg4: memref<120x84xf32, #tpu.memory_space<vmem>>, %arg5: memref<1x84xf32, #tpu.memory_space<vmem>>, %arg6: memref<84x3xf32, #tpu.memory_space<vmem>>, %arg7: memref<1x3xf32, #tpu.memory_space<vmem>>, %arg8: memref<2x3xf32, #tpu.memory_space<vmem>>) attributes {dimension_semantics = [#tpu.dimension_semantics<parallel>], iteration_bounds = array<i64: 1>, scalar_prefetch = 0 : i64, scratch_operands = 0 : i64, tpu.core_type = #tpu.core_type<tc>, window_params = [{transform_indices = @transform_0, window_bounds = array<i64: 2, 8, 80>}, {pipeline_mode = #tpu.pipeline_mode<synchronous>, transform_indices = @transform_1, window_bounds = array<i64: 5, 80, 120>}, {pipeline_mode = #tpu.pipeline_mode<synchronous>, transform_indices = @transform_2, window_bounds = array<i64: 1, 120>}, {pipeline_mode = #tpu.pipeline_mode<synchronous>, transform_indices = @transform_3, window_bounds = array<i64: 120, 84>}, {pipeline_mode = #tpu.pipeline_mode<synchronous>, transform_indices = @transform_4, window_bounds = array<i64: 1, 84>}, {pipeline_mode = #tpu.pipeline_mode<synchronous>, transform_indices = @transform_5, window_bounds = array<i64: 84, 3>}, {pipeline_mode = #tpu.pipeline_mode<synchronous>, transform_indices = @transform_6, window_bounds = array<i64: 1, 3>}, {transform_indices = @transform_7, window_bounds = array<i64: 2, 3>}]} {
    %cst = arith.constant 0.000000e+00 : f32
    %0 = vector.broadcast %cst : f32 to vector<2x120xf32>
    %c0 = arith.constant 0 : index
    %c0_0 = arith.constant 0 : index
    %c0_1 = arith.constant 0 : index
    %1 = vector.load %arg1[%c0, %c0_0, %c0_1] : memref<2x8x80xf32, #tpu.memory_space<vmem>>, vector<2x1x80xf32>
    %2 = vector.shape_cast %1 : vector<2x1x80xf32> to vector<2x80xf32>
    %c0_2 = arith.constant 0 : index
    %c0_3 = arith.constant 0 : index
    %c0_4 = arith.constant 0 : index
    %3 = vector.load %arg2[%c0_2, %c0_3, %c0_4] : memref<5x80x120xf32, #tpu.memory_space<vmem>>, vector<1x80x120xf32>
    %4 = vector.shape_cast %3 : vector<1x80x120xf32> to vector<80x120xf32>
    %cst_5 = arith.constant dense<0.000000e+00> : vector<2x120xf32>
    %5 = tpu.matmul %2, %4, %cst_5 {dimension_numbers = #tpu.dot_dimension_numbers<[1], [0], [0], [1], [0, 0, 1, 1], [], []>} : vector<2x80xf32>, vector<80x120xf32>, vector<2x120xf32> -> vector<2x120xf32>
    %6 = arith.addf %0, %5 : vector<2x120xf32>
    %c0_6 = arith.constant 0 : index
    %c1 = arith.constant 1 : index
    %c0_7 = arith.constant 0 : index
    %7 = vector.load %arg1[%c0_6, %c1, %c0_7] : memref<2x8x80xf32, #tpu.memory_space<vmem>>, vector<2x1x80xf32>
    %8 = vector.shape_cast %7 : vector<2x1x80xf32> to vector<2x80xf32>
    %c1_8 = arith.constant 1 : index
    %c0_9 = arith.constant 0 : index
    %c0_10 = arith.constant 0 : index
    %9 = vector.load %arg2[%c1_8, %c0_9, %c0_10] : memref<5x80x120xf32, #tpu.memory_space<vmem>>, vector<1x80x120xf32>
    %10 = vector.shape_cast %9 : vector<1x80x120xf32> to vector<80x120xf32>
    %cst_11 = arith.constant dense<0.000000e+00> : vector<2x120xf32>
    %11 = tpu.matmul %8, %10, %cst_11 {dimension_numbers = #tpu.dot_dimension_numbers<[1], [0], [0], [1], [0, 0, 1, 1], [], []>} : vector<2x80xf32>, vector<80x120xf32>, vector<2x120xf32> -> vector<2x120xf32>
    %12 = arith.addf %6, %11 : vector<2x120xf32>
    %c0_12 = arith.constant 0 : index
    %c2 = arith.constant 2 : index
    %c0_13 = arith.constant 0 : index
    %13 = vector.load %arg1[%c0_12, %c2, %c0_13] : memref<2x8x80xf32, #tpu.memory_space<vmem>>, vector<2x1x80xf32>
    %14 = vector.shape_cast %13 : vector<2x1x80xf32> to vector<2x80xf32>
    %c2_14 = arith.constant 2 : index
    %c0_15 = arith.constant 0 : index
    %c0_16 = arith.constant 0 : index
    %15 = vector.load %arg2[%c2_14, %c0_15, %c0_16] : memref<5x80x120xf32, #tpu.memory_space<vmem>>, vector<1x80x120xf32>
    %16 = vector.shape_cast %15 : vector<1x80x120xf32> to vector<80x120xf32>
    %cst_17 = arith.constant dense<0.000000e+00> : vector<2x120xf32>
    %17 = tpu.matmul %14, %16, %cst_17 {dimension_numbers = #tpu.dot_dimension_numbers<[1], [0], [0], [1], [0, 0, 1, 1], [], []>} : vector<2x80xf32>, vector<80x120xf32>, vector<2x120xf32> -> vector<2x120xf32>
    %18 = arith.addf %12, %17 : vector<2x120xf32>
    %c0_18 = arith.constant 0 : index
    %c3 = arith.constant 3 : index
    %c0_19 = arith.constant 0 : index
    %19 = vector.load %arg1[%c0_18, %c3, %c0_19] : memref<2x8x80xf32, #tpu.memory_space<vmem>>, vector<2x1x80xf32>
    %20 = vector.shape_cast %19 : vector<2x1x80xf32> to vector<2x80xf32>
    %c3_20 = arith.constant 3 : index
    %c0_21 = arith.constant 0 : index
    %c0_22 = arith.constant 0 : index
    %21 = vector.load %arg2[%c3_20, %c0_21, %c0_22] : memref<5x80x120xf32, #tpu.memory_space<vmem>>, vector<1x80x120xf32>
    %22 = vector.shape_cast %21 : vector<1x80x120xf32> to vector<80x120xf32>
    %cst_23 = arith.constant dense<0.000000e+00> : vector<2x120xf32>
    %23 = tpu.matmul %20, %22, %cst_23 {dimension_numbers = #tpu.dot_dimension_numbers<[1], [0], [0], [1], [0, 0, 1, 1], [], []>} : vector<2x80xf32>, vector<80x120xf32>, vector<2x120xf32> -> vector<2x120xf32>
    %24 = arith.addf %18, %23 : vector<2x120xf32>
    %c0_24 = arith.constant 0 : index
    %c4 = arith.constant 4 : index
    %c0_25 = arith.constant 0 : index
    %25 = vector.load %arg1[%c0_24, %c4, %c0_25] : memref<2x8x80xf32, #tpu.memory_space<vmem>>, vector<2x1x80xf32>
    %26 = vector.shape_cast %25 : vector<2x1x80xf32> to vector<2x80xf32>
    %c4_26 = arith.constant 4 : index
    %c0_27 = arith.constant 0 : index
    %c0_28 = arith.constant 0 : index
    %27 = vector.load %arg2[%c4_26, %c0_27, %c0_28] : memref<5x80x120xf32, #tpu.memory_space<vmem>>, vector<1x80x120xf32>
    %28 = vector.shape_cast %27 : vector<1x80x120xf32> to vector<80x120xf32>
    %cst_29 = arith.constant dense<0.000000e+00> : vector<2x120xf32>
    %29 = tpu.matmul %26, %28, %cst_29 {dimension_numbers = #tpu.dot_dimension_numbers<[1], [0], [0], [1], [0, 0, 1, 1], [], []>} : vector<2x80xf32>, vector<80x120xf32>, vector<2x120xf32> -> vector<2x120xf32>
    %30 = arith.addf %24, %29 : vector<2x120xf32>
    %c0_30 = arith.constant 0 : index
    %c0_31 = arith.constant 0 : index
    %31 = vector.load %arg3[%c0_30, %c0_31] : memref<1x120xf32, #tpu.memory_space<vmem>>, vector<1x120xf32>
    %32 = vector.broadcast %31 : vector<1x120xf32> to vector<2x120xf32>
    %33 = arith.addf %30, %32 : vector<2x120xf32>
    %34 = math.tanh %33 : vector<2x120xf32>
    %c0_32 = arith.constant 0 : index
    %c0_33 = arith.constant 0 : index
    %35 = vector.load %arg4[%c0_32, %c0_33] : memref<120x84xf32, #tpu.memory_space<vmem>>, vector<120x84xf32>
    %cst_34 = arith.constant dense<0.000000e+00> : vector<2x84xf32>
    %36 = tpu.matmul %34, %35, %cst_34 {dimension_numbers = #tpu.dot_dimension_numbers<[1], [0], [0], [1], [0, 0, 1, 1], [], []>} : vector<2x120xf32>, vector<120x84xf32>, vector<2x84xf32> -> vector<2x84xf32>
    %c0_35 = arith.constant 0 : index
    %c0_36 = arith.constant 0 : index
    %37 = vector.load %arg5[%c0_35, %c0_36] : memref<1x84xf32, #tpu.memory_space<vmem>>, vector<1x84xf32>
    %38 = vector.broadcast %37 : vector<1x84xf32> to vector<2x84xf32>
    %39 = arith.addf %36, %38 : vector<2x84xf32>
    %40 = math.tanh %39 : vector<2x84xf32>
    %c0_37 = arith.constant 0 : index
    %c0_38 = arith.constant 0 : index
    %41 = vector.load %arg6[%c0_37, %c0_38] : memref<84x3xf32, #tpu.memory_space<vmem>>, vector<84x3xf32>
    %cst_39 = arith.constant dense<0.000000e+00> : vector<2x3xf32>
    %42 = tpu.matmul %40, %41, %cst_39 {dimension_numbers = #tpu.dot_dimension_numbers<[1], [0], [0], [1], [0, 0, 1, 1], [], []>} : vector<2x84xf32>, vector<84x3xf32>, vector<2x3xf32> -> vector<2x3xf32>
    %c0_40 = arith.constant 0 : index
    %c0_41 = arith.constant 0 : index
    %43 = vector.load %arg7[%c0_40, %c0_41] : memref<1x3xf32, #tpu.memory_space<vmem>>, vector<1x3xf32>
    %44 = vector.broadcast %43 : vector<1x3xf32> to vector<2x3xf32>
    %45 = arith.addf %42, %44 : vector<2x3xf32>
    %c0_42 = arith.constant 0 : index
    %c0_43 = arith.constant 0 : index
    %46 = vector.load %arg8[%c0_42, %c0_43] : memref<2x3xf32, #tpu.memory_space<vmem>>, vector<2x3xf32>
    tpu.vector_store %arg8[%c0_42, %c0_43], %45 {strides = array<i32>} : memref<2x3xf32, #tpu.memory_space<vmem>>, vector<2x3xf32>,
    return
  }
  func.func @transform_0(%arg0: i32) -> (i32, i32, i32) {
    %c0_i32 = arith.constant 0 : i32
    %c0_i32_0 = arith.constant 0 : i32
    %c0_i32_1 = arith.constant 0 : i32
    return %arg0, %c0_i32, %c0_i32_0 : i32, i32, i32
  }
  func.func @transform_1(%arg0: i32) -> (i32, i32, i32) {
    %c0_i32 = arith.constant 0 : i32
    %c0_i32_0 = arith.constant 0 : i32
    %c0_i32_1 = arith.constant 0 : i32
    %c0_i32_2 = arith.constant 0 : i32
    return %c0_i32, %c0_i32_0, %c0_i32_1 : i32, i32, i32
  }
  func.func @transform_2(%arg0: i32) -> (i32, i32) {
    %c0_i32 = arith.constant 0 : i32
    %c0_i32_0 = arith.constant 0 : i32
    %c0_i32_1 = arith.constant 0 : i32
    return %c0_i32, %c0_i32_0 : i32, i32
  }
  func.func @transform_3(%arg0: i32) -> (i32, i32) {
    %c0_i32 = arith.constant 0 : i32
    %c0_i32_0 = arith.constant 0 : i32
    %c0_i32_1 = arith.constant 0 : i32
    return %c0_i32, %c0_i32_0 : i32, i32
  }
  func.func @transform_4(%arg0: i32) -> (i32, i32) {
    %c0_i32 = arith.constant 0 : i32
    %c0_i32_0 = arith.constant 0 : i32
    %c0_i32_1 = arith.constant 0 : i32
    return %c0_i32, %c0_i32_0 : i32, i32
  }
  func.func @transform_5(%arg0: i32) -> (i32, i32) {
    %c0_i32 = arith.constant 0 : i32
    %c0_i32_0 = arith.constant 0 : i32
    %c0_i32_1 = arith.constant 0 : i32
    return %c0_i32, %c0_i32_0 : i32, i32
  }
  func.func @transform_6(%arg0: i32) -> (i32, i32) {
    %c0_i32 = arith.constant 0 : i32
    %c0_i32_0 = arith.constant 0 : i32
    %c0_i32_1 = arith.constant 0 : i32
    return %c0_i32, %c0_i32_0 : i32, i32
  }
  func.func @transform_7(%arg0: i32) -> (i32, i32) {
    %c0_i32 = arith.constant 0 : i32
    %c0_i32_0 = arith.constant 0 : i32
    return %arg0, %c0_i32 : i32, i32
  }
}

</mosaic_0001>

<llo_original>
// kernel: gm_images_net_forward.5
$region0: #{gm_images_net_forward.5}
  #allocation0 [shape = 'u32[]', space=smem, size = 0x4, offset = 0x4, fixed_abs, tag = 'smem constant byte address 0x4 - core index']
  #allocation1 [shape = 'u32[72,128]{1,0:T(1,128)}', space=vmem, size = 0x9000, scoped, tag = 'internal scratch']
  %s0 = inlined_call_operand.vmem [shape: f32[2,8,80], index: 0, kind: input, shape index: {}]
  %s1 = inlined_call_operand.vmem [shape: f32[5,80,120], index: 1, kind: input, shape index: {}]
  %s2 = inlined_call_operand.vmem [shape: f32[1,120], index: 2, kind: input, shape index: {}]
  %s3 = inlined_call_operand.vmem [shape: f32[120,84], index: 3, kind: input, shape index: {}]
  %s4 = inlined_call_operand.vmem [shape: f32[1,84], index: 4, kind: input, shape index: {}]
  %s5 = inlined_call_operand.vmem [shape: f32[84,3], index: 5, kind: input, shape index: {}]
  %s6 = inlined_call_operand.vmem [shape: f32[1,3], index: 6, kind: input, shape index: {}]
  %s7 = inlined_call_operand.hbm [shape: f32[2,3], index: 7, kind: output, shape index: {}]
  %s8 = sld [smem:[#allocation0]]
  $region38: #{gm_images_net_forward.5} parent=0
    _
  %s10 = ssub.s32 1, %s8
  %s11 = scalar_select 0, %s10, %s8
  $region1: #{gm_images_net_forward.5} parent=0
    #allocation2 [shape = 'u8[1024]{0}', space=vmem, size = 0x400, scoped, tag = 'output window, operand 0, single buffered']
    #allocation3 [shape = 's32[1]{0}', space=sflag, size = 0x4, scoped, tag = 'scoped memory for gm_images_net_forward.5']
    %12 = vsyncpa [#allocation3], 0
    // Predicated region
    $region2: #{gm_images_net_forward.5} parent=1 // pred_check
      _
    $region3: #{gm_images_net_forward.5} parent=1 // pred_check_branch
      %14 = sbr.rel (0) target = $region5
    $region4: #{gm_images_net_forward.5} parent=1 // pred_region
      _
    $region5: #{gm_images_net_forward.5} parent=1 // pred_fallthru
      _
    // Predicated region
    $region6: #{gm_images_net_forward.5} parent=1 // pred_check
      _
    $region7: #{gm_images_net_forward.5} parent=1 // pred_check_branch
      %16 = sbr.rel (0) target = $region9
    $region8: #{gm_images_net_forward.5} parent=1 // pred_region
      _
    $region9: #{gm_images_net_forward.5} parent=1 // pred_fallthru
      _
    // Predicated region
    $region10: #{gm_images_net_forward.5} parent=1 // pred_check
      _
    $region11: #{gm_images_net_forward.5} parent=1 // pred_check_branch
      %18 = sbr.rel (0) target = $region13
    $region12: #{gm_images_net_forward.5} parent=1 // pred_region
      _
    $region13: #{gm_images_net_forward.5} parent=1 // pred_fallthru
      _
    // Predicated region
    $region14: #{gm_images_net_forward.5} parent=1 // pred_check
      _
    $region15: #{gm_images_net_forward.5} parent=1 // pred_check_branch
      %20 = sbr.rel (0) target = $region17
    $region16: #{gm_images_net_forward.5} parent=1 // pred_region
      _
    $region17: #{gm_images_net_forward.5} parent=1 // pred_fallthru
      _
    // Predicated region
    $region18: #{gm_images_net_forward.5} parent=1 // pred_check
      _
    $region19: #{gm_images_net_forward.5} parent=1 // pred_check_branch
      %22 = sbr.rel (0) target = $region21
    $region20: #{gm_images_net_forward.5} parent=1 // pred_region
      _
    $region21: #{gm_images_net_forward.5} parent=1 // pred_fallthru
      _
    // Predicated region
    $region22: #{gm_images_net_forward.5} parent=1 // pred_check
      _
    $region23: #{gm_images_net_forward.5} parent=1 // pred_check_branch
      %24 = sbr.rel (0) target = $region25
    $region24: #{gm_images_net_forward.5} parent=1 // pred_region
      _
    $region25: #{gm_images_net_forward.5} parent=1 // pred_fallthru
      _
    // Predicated region
    $region26: #{gm_images_net_forward.5} parent=1 // pred_check
      _
    $region27: #{gm_images_net_forward.5} parent=1 // pred_check_branch
      %26 = sbr.rel (0) target = $region29
    $region28: #{gm_images_net_forward.5} parent=1 // pred_region
      _
    $region29: #{gm_images_net_forward.5} parent=1 // pred_fallthru
      _
    %v27 = vld [vmem:[%s0] sm:$0x1]
    %v28 = vld [vmem:[%s0 + $0x8] sm:$0x1]
    %v29 = vld [vmem:[%s1] sm:$0xff]
    %v30 = vld [vmem:[%s1 + $0x8] sm:$0xff]
    %v31 = vld [vmem:[%s1 + $0x10] sm:$0xff]
    %v32 = vld [vmem:[%s1 + $0x18] sm:$0xff]
    %v33 = vld [vmem:[%s1 + $0x20] sm:$0xff]
    %v34 = vld [vmem:[%s1 + $0x28] sm:$0xff]
    %v35 = vld [vmem:[%s1 + $0x30] sm:$0xff]
    %v36 = vld [vmem:[%s1 + $0x38] sm:$0xff]
    %v37 = vld [vmem:[%s1 + $0x40] sm:$0xff]
    %v38 = vld [vmem:[%s1 + $0x48] sm:$0xff]
    %v39 = vld [vmem:[%s0 + $0x1] sm:$0x1]
    %v40 = vld [vmem:[%s0 + $0x9] sm:$0x1]
    %s41 = scalar_lea.vmem %s1, 80
    %v42 = vld [vmem:[%s41] sm:$0xff]
    %v43 = vld [vmem:[%s41 + $0x8] sm:$0xff]
    %v44 = vld [vmem:[%s41 + $0x10] sm:$0xff]
    %v45 = vld [vmem:[%s41 + $0x18] sm:$0xff]
    %v46 = vld [vmem:[%s41 + $0x20] sm:$0xff]
    %v47 = vld [vmem:[%s41 + $0x28] sm:$0xff]
    %v48 = vld [vmem:[%s41 + $0x30] sm:$0xff]
    %v49 = vld [vmem:[%s41 + $0x38] sm:$0xff]
    %v50 = vld [vmem:[%s41 + $0x40] sm:$0xff]
    %v51 = vld [vmem:[%s41 + $0x48] sm:$0xff]
    %v54 = vrot.slane %v40, 7
    %vm55 = vcmask 1041409
    %v56 = vsel %vm55, %v54, %v39
    %vm57 = vcmask 654336
    %v58 = vsel %vm57, %v56, 0
    %60 = vmatpush.msra.mxu0 0.0
    %61 = vmatpush.msra.mxu0 0.0
    %62 = vmatpush.msra.mxu0 0.0
    %63 = vmatpush.msra.mxu0 0.0
    %64 = vmatpush.msra.mxu0 0.0
    %65 = vmatpush.msra.mxu0 0.0
    %66 = vmatpush.msra.mxu0 %v51
    %67 = vmatpush.msra.mxu0 %v50
    %68 = vmatpush.msra.mxu0 %v49
    %69 = vmatpush.msra.mxu0 %v48
    %70 = vmatpush.msra.mxu0 %v47
    %71 = vmatpush.msra.mxu0 %v46
    %72 = vmatpush.msra.mxu0 %v45
    %73 = vmatpush.msra.mxu0 %v44
    %74 = vmatpush.msra.mxu0 %v43
    %75 = vmatpush.msra.mxu0 %v42
    %76 = vmatmul.f32.gmra.mxu0 %v58
    %v77 = vpop.f32.mrf.mxu0
    %v78 = vadd.f32 0.0, %v77
    %79 = vdwg.mxu0
    %v82 = vrot.slane %v28, 7
    %v83 = vsel %vm55, %v82, %v27
    %v84 = vsel %vm57, %v83, 0
    %86 = vmatpush.msra.mxu0 0.0
    %87 = vmatpush.msra.mxu0 0.0
    %88 = vmatpush.msra.mxu0 0.0
    %89 = vmatpush.msra.mxu0 0.0
    %90 = vmatpush.msra.mxu0 0.0
    %91 = vmatpush.msra.mxu0 0.0
    %92 = vmatpush.msra.mxu0 %v38
    %93 = vmatpush.msra.mxu0 %v37
    %94 = vmatpush.msra.mxu0 %v36
    %95 = vmatpush.msra.mxu0 %v35
    %96 = vmatpush.msra.mxu0 %v34
    %97 = vmatpush.msra.mxu0 %v33
    %98 = vmatpush.msra.mxu0 %v32
    %99 = vmatpush.msra.mxu0 %v31
    %100 = vmatpush.msra.mxu0 %v30
    %101 = vmatpush.msra.mxu0 %v29
    %102 = vmatmul.f32.gmra.mxu0 %v84
    %v103 = vpop.f32.mrf.mxu0
    %v104 = vadd.f32 %v78, %v103
    %105 = vdwg.mxu0
    %v106 = vld [vmem:[%s0 + $0x2] sm:$0x1]
    %v107 = vld [vmem:[%s0 + $0xa] sm:$0x1]
    %s108 = scalar_lea.vmem %s1, 160
    %v109 = vld [vmem:[%s108] sm:$0xff]
    %v110 = vld [vmem:[%s108 + $0x8] sm:$0xff]
    %v111 = vld [vmem:[%s108 + $0x10] sm:$0xff]
    %v112 = vld [vmem:[%s108 + $0x18] sm:$0xff]
    %v113 = vld [vmem:[%s108 + $0x20] sm:$0xff]
    %v114 = vld [vmem:[%s108 + $0x28] sm:$0xff]
    %v115 = vld [vmem:[%s108 + $0x30] sm:$0xff]
    %v116 = vld [vmem:[%s108 + $0x38] sm:$0xff]
    %v117 = vld [vmem:[%s108 + $0x40] sm:$0xff]
    %v118 = vld [vmem:[%s108 + $0x48] sm:$0xff]
    %v121 = vrot.slane %v107, 7
    %v122 = vsel %vm55, %v121, %v106
    %v123 = vsel %vm57, %v122, 0
    %125 = vmatpush.msra.mxu0 0.0
    %126 = vmatpush.msra.mxu0 0.0
    %127 = vmatpush.msra.mxu0 0.0
    %128 = vmatpush.msra.mxu0 0.0
    %129 = vmatpush.msra.mxu0 0.0
    %130 = vmatpush.msra.mxu0 0.0
    %131 = vmatpush.msra.mxu0 %v118
    %132 = vmatpush.msra.mxu0 %v117
    %133 = vmatpush.msra.mxu0 %v116
    %134 = vmatpush.msra.mxu0 %v115
    %135 = vmatpush.msra.mxu0 %v114
    %136 = vmatpush.msra.mxu0 %v113
    %137 = vmatpush.msra.mxu0 %v112
    %138 = vmatpush.msra.mxu0 %v111
    %139 = vmatpush.msra.mxu0 %v110
    %140 = vmatpush.msra.mxu0 %v109
    %141 = vmatmul.f32.gmra.mxu0 %v123
    %v142 = vpop.f32.mrf.mxu0
    %v143 = vadd.f32 0.0, %v142
    %144 = vdwg.mxu0
    %v145 = vadd.f32 %v104, %v143
    %v146 = vld [vmem:[%s0 + $0x3] sm:$0x1]
    %v147 = vld [vmem:[%s0 + $0xb] sm:$0x1]
    %s148 = scalar_lea.vmem %s1, 240
    %v149 = vld [vmem:[%s148] sm:$0xff]
    %v150 = vld [vmem:[%s148 + $0x8] sm:$0xff]
    %v151 = vld [vmem:[%s148 + $0x10] sm:$0xff]
    %v152 = vld [vmem:[%s148 + $0x18] sm:$0xff]
    %v153 = vld [vmem:[%s148 + $0x20] sm:$0xff]
    %v154 = vld [vmem:[%s148 + $0x28] sm:$0xff]
    %v155 = vld [vmem:[%s148 + $0x30] sm:$0xff]
    %v156 = vld [vmem:[%s148 + $0x38] sm:$0xff]
    %v157 = vld [vmem:[%s148 + $0x40] sm:$0xff]
    %v158 = vld [vmem:[%s148 + $0x48] sm:$0xff]
    %v161 = vrot.slane %v147, 7
    %v162 = vsel %vm55, %v161, %v146
    %v163 = vsel %vm57, %v162, 0
    %165 = vmatpush.msra.mxu0 0.0
    %166 = vmatpush.msra.mxu0 0.0
    %167 = vmatpush.msra.mxu0 0.0
    %168 = vmatpush.msra.mxu0 0.0
    %169 = vmatpush.msra.mxu0 0.0
    %170 = vmatpush.msra.mxu0 0.0
    %171 = vmatpush.msra.mxu0 %v158
    %172 = vmatpush.msra.mxu0 %v157
    %173 = vmatpush.msra.mxu0 %v156
    %174 = vmatpush.msra.mxu0 %v155
    %175 = vmatpush.msra.mxu0 %v154
    %176 = vmatpush.msra.mxu0 %v153
    %177 = vmatpush.msra.mxu0 %v152
    %178 = vmatpush.msra.mxu0 %v151
    %179 = vmatpush.msra.mxu0 %v150
    %180 = vmatpush.msra.mxu0 %v149
    %181 = vmatmul.f32.gmra.mxu0 %v163
    %v182 = vpop.f32.mrf.mxu0
    %v183 = vadd.f32 0.0, %v182
    %184 = vdwg.mxu0
    %v185 = vadd.f32 %v145, %v183
    %v186 = vld [vmem:[%s0 + $0x4] sm:$0x1]
    %v187 = vld [vmem:[%s0 + $0xc] sm:$0x1]
    %s188 = scalar_lea.vmem %s1, 320
    %v189 = vld [vmem:[%s188] sm:$0xff]
    %v190 = vld [vmem:[%s188 + $0x8] sm:$0xff]
    %v191 = vld [vmem:[%s188 + $0x10] sm:$0xff]
    %v192 = vld [vmem:[%s188 + $0x18] sm:$0xff]
    %v193 = vld [vmem:[%s188 + $0x20] sm:$0xff]
    %v194 = vld [vmem:[%s188 + $0x28] sm:$0xff]
    %v195 = vld [vmem:[%s188 + $0x30] sm:$0xff]
    %v196 = vld [vmem:[%s188 + $0x38] sm:$0xff]
    %v197 = vld [vmem:[%s188 + $0x40] sm:$0xff]
    %v198 = vld [vmem:[%s188 + $0x48] sm:$0xff]
    %v201 = vrot.slane %v187, 7
    %v202 = vsel %vm55, %v201, %v186
    %v203 = vsel %vm57, %v202, 0
    %205 = vmatpush.msra.mxu0 0.0
    %206 = vmatpush.msra.mxu0 0.0
    %207 = vmatpush.msra.mxu0 0.0
    %208 = vmatpush.msra.mxu0 0.0
    %209 = vmatpush.msra.mxu0 0.0
    %210 = vmatpush.msra.mxu0 0.0
    %211 = vmatpush.msra.mxu0 %v198
    %212 = vmatpush.msra.mxu0 %v197
    %213 = vmatpush.msra.mxu0 %v196
    %214 = vmatpush.msra.mxu0 %v195
    %215 = vmatpush.msra.mxu0 %v194
    %216 = vmatpush.msra.mxu0 %v193
    %217 = vmatpush.msra.mxu0 %v192
    %218 = vmatpush.msra.mxu0 %v191
    %219 = vmatpush.msra.mxu0 %v190
    %220 = vmatpush.msra.mxu0 %v189
    %221 = vmatmul.f32.gmra.mxu0 %v203
    %v222 = vpop.f32.mrf.mxu0
    %v223 = vadd.f32 0.0, %v222
    %224 = vdwg.mxu0
    %v225 = vadd.f32 %v185, %v223
    %v226 = vld [vmem:[%s2] sm:$0x1]
    %v228 = vperm.slane %v226, 0
    %v230 = vadd.f32 %v225, %v228
    %v231 = vtanh.pop %v230
    %v232 = vld [vmem:[%s3] sm:$0xff]
    %v233 = vld [vmem:[%s3 + $0x8] sm:$0xff]
    %v234 = vld [vmem:[%s3 + $0x10] sm:$0xff]
    %v235 = vld [vmem:[%s3 + $0x18] sm:$0xff]
    %v236 = vld [vmem:[%s3 + $0x20] sm:$0xff]
    %v237 = vld [vmem:[%s3 + $0x28] sm:$0xff]
    %v238 = vld [vmem:[%s3 + $0x30] sm:$0xff]
    %v239 = vld [vmem:[%s3 + $0x38] sm:$0xff]
    %v240 = vld [vmem:[%s3 + $0x40] sm:$0xff]
    %v241 = vld [vmem:[%s3 + $0x48] sm:$0xff]
    %v242 = vld [vmem:[%s3 + $0x50] sm:$0xff]
    %v243 = vld [vmem:[%s3 + $0x58] sm:$0xff]
    %v244 = vld [vmem:[%s3 + $0x60] sm:$0xff]
    %v245 = vld [vmem:[%s3 + $0x68] sm:$0xff]
    %v246 = vld [vmem:[%s3 + $0x70] sm:$0xff]
    %v247 = vld [vmem:[%s4] sm:$0x1]
    %v249 = vperm.slane %v247, 0
    %vm251 = vcmask 982016
    %v253 = vsel %vm251, %v231, 0
    %255 = vmatpush.msra.mxu0 0.0
    %256 = vmatpush.msra.mxu0 %v246
    %257 = vmatpush.msra.mxu0 %v245
    %258 = vmatpush.msra.mxu0 %v244
    %259 = vmatpush.msra.mxu0 %v243
    %260 = vmatpush.msra.mxu0 %v242
    %261 = vmatpush.msra.mxu0 %v241
    %262 = vmatpush.msra.mxu0 %v240
    %263 = vmatpush.msra.mxu0 %v239
    %264 = vmatpush.msra.mxu0 %v238
    %265 = vmatpush.msra.mxu0 %v237
    %266 = vmatpush.msra.mxu0 %v236
    %267 = vmatpush.msra.mxu0 %v235
    %268 = vmatpush.msra.mxu0 %v234
    %269 = vmatpush.msra.mxu0 %v233
    %270 = vmatpush.msra.mxu0 %v232
    %271 = vmatmul.f32.gmra.mxu0 %v253
    %v272 = vpop.f32.mrf.mxu0
    %v273 = vadd.f32 %v249, %v272
    %274 = vdwg.mxu0
    %v275 = vtanh.pop %v273
    %v276 = vld [vmem:[%s5] sm:$0xff]
    %v277 = vld [vmem:[%s5 + $0x8] sm:$0xff]
    %v278 = vld [vmem:[%s5 + $0x10] sm:$0xff]
    %v279 = vld [vmem:[%s5 + $0x18] sm:$0xff]
    %v280 = vld [vmem:[%s5 + $0x20] sm:$0xff]
    %v281 = vld [vmem:[%s5 + $0x28] sm:$0xff]
    %v282 = vld [vmem:[%s5 + $0x30] sm:$0xff]
    %v283 = vld [vmem:[%s5 + $0x38] sm:$0xff]
    %v284 = vld [vmem:[%s5 + $0x40] sm:$0xff]
    %v285 = vld [vmem:[%s5 + $0x48] sm:$0xff]
    %v286 = vld [vmem:[%s5 + $0x50] sm:$0xf]
    %v287 = vld [vmem:[%s6] sm:$0x1]
    %v289 = vperm.slane %v287, 0
    %vm291 = vcmask 687104
    %v293 = vsel %vm291, %v275, 0
    %vm295 = vcmask 1043456
    %v297 = vsel %vm295, %v286, 0
    %299 = vmatpush.msra.mxu0 0.0
    %300 = vmatpush.msra.mxu0 0.0
    %301 = vmatpush.msra.mxu0 0.0
    %302 = vmatpush.msra.mxu0 0.0
    %303 = vmatpush.msra.mxu0 0.0
    %304 = vmatpush.msra.mxu0 %v297
    %305 = vmatpush.msra.mxu0 %v285
    %306 = vmatpush.msra.mxu0 %v284
    %307 = vmatpush.msra.mxu0 %v283
    %308 = vmatpush.msra.mxu0 %v282
    %309 = vmatpush.msra.mxu0 %v281
    %310 = vmatpush.msra.mxu0 %v280
    %311 = vmatpush.msra.mxu0 %v279
    %312 = vmatpush.msra.mxu0 %v278
    %313 = vmatpush.msra.mxu0 %v277
    %314 = vmatpush.msra.mxu0 %v276
    %315 = vmatmul.f32.gmra.mxu0 %v293
    %v316 = vpop.f32.mrf.mxu0
    %v317 = vadd.f32 %v289, %v316
    %318 = vdwg.mxu0
    %vm319 = vcmask 17408
    %320 = vst.msk [vmem:[#allocation2] sm:$0x3] %vm319, %v317
    // Predicated region
    $region30: #{gm_images_net_forward.5} parent=1 // pred_check
      _
    $region31: #{gm_images_net_forward.5} parent=1 // pred_check_branch
      %322 = sbr.rel (0) target = $region33
    $region32: #{gm_images_net_forward.5} parent=1 // pred_region
      %324 = vsyncadd [#allocation3], 0
      %s326 = sshll.u32 [#allocation2], 4
      %s327 = int_to_ptr.vmem [resolvable:$true] %s326
      %s328 = sshll.u32 %s7, 4
      %s329 = int_to_ptr.hbm [resolvable:$true] %s328
      %331 = dma.vmem_to_hbm [thread:$0]  %s327, 32, %s329, [#allocation3]
    $region33: #{gm_images_net_forward.5} parent=1 // pred_fallthru
      _
    // Predicated region
    $region34: #{gm_images_net_forward.5} parent=1 // pred_check
      _
    $region35: #{gm_images_net_forward.5} parent=1 // pred_check_branch
      %333 = sbr.rel (0) target = $region37
    $region36: #{gm_images_net_forward.5} parent=1 // pred_region
      %335 = dma.done [#allocation3], 32
    $region37: #{gm_images_net_forward.5} parent=1 // pred_fallthru
      _
    %336 = vsyncpa [#allocation3], 1

// kernel: gm_images_net_forward.4
$region0: #{gm_images_net_forward.4}
  #allocation0 [shape = 'u32[]', space=smem, size = 0x4, offset = 0x4, fixed_abs, tag = 'smem constant byte address 0x4 - core index']
  #allocation1 [shape = 'u32[72,128]{1,0:T(1,128)}', space=vmem, size = 0x9000, scoped, tag = 'internal scratch']
  %s0 = inlined_call_operand.vmem [shape: f32[32,84], index: 0, kind: input, shape index: {}]
  %s1 = inlined_call_operand.vmem [shape: f32[5,84,160], index: 1, kind: input, shape index: {}]
  %s2 = inlined_call_operand.vmem [shape: f32[1,160], index: 2, kind: input, shape index: {}]
  %s3 = inlined_call_operand.vmem [shape: f32[160,80], index: 3, kind: input, shape index: {}]
  %s4 = inlined_call_operand.vmem [shape: f32[16,80], index: 4, kind: output, shape index: {}]
  %s5 = sld [smem:[#allocation0]]
  $region26: #{gm_images_net_forward.4} parent=0
    _
  %s7 = ssub.s32 1, %s5
  %s8 = scalar_select 0, %s7, %s5
  // Predicated region
  $region2: #{gm_images_net_forward.4} parent=0 // pred_check
    _
  $region3: #{gm_images_net_forward.4} parent=0 // pred_check_branch
    %10 = sbr.rel (0) target = $region5
  $region4: #{gm_images_net_forward.4} parent=0 // pred_region
    _
  $region5: #{gm_images_net_forward.4} parent=0 // pred_fallthru
    _
  // Predicated region
  $region6: #{gm_images_net_forward.4} parent=0 // pred_check
    _
  $region7: #{gm_images_net_forward.4} parent=0 // pred_check_branch
    %12 = sbr.rel (0) target = $region9
  $region8: #{gm_images_net_forward.4} parent=0 // pred_region
    _
  $region9: #{gm_images_net_forward.4} parent=0 // pred_fallthru
    _
  // Predicated region
  $region10: #{gm_images_net_forward.4} parent=0 // pred_check
    _
  $region11: #{gm_images_net_forward.4} parent=0 // pred_check_branch
    %14 = sbr.rel (0) target = $region13
  $region12: #{gm_images_net_forward.4} parent=0 // pred_region
    _
  $region13: #{gm_images_net_forward.4} parent=0 // pred_fallthru
    _
  // Predicated region
  $region14: #{gm_images_net_forward.4} parent=0 // pred_check
    _
  $region15: #{gm_images_net_forward.4} parent=0 // pred_check_branch
    %16 = sbr.rel (0) target = $region17
  $region16: #{gm_images_net_forward.4} parent=0 // pred_region
    _
  $region17: #{gm_images_net_forward.4} parent=0 // pred_fallthru
    _
  %v17 = vld [vmem:[%s1] sm:$0xff]
  %v18 = vld [vmem:[%s1 + $0x8] sm:$0xff]
  %v19 = vld [vmem:[%s1 + $0x10] sm:$0xff]
  %v20 = vld [vmem:[%s1 + $0x18] sm:$0xff]
  %v21 = vld [vmem:[%s1 + $0x20] sm:$0xff]
  %v22 = vld [vmem:[%s1 + $0x28] sm:$0xff]
  %v23 = vld [vmem:[%s1 + $0x30] sm:$0xff]
  %v24 = vld [vmem:[%s1 + $0x38] sm:$0xff]
  %v25 = vld [vmem:[%s1 + $0x40] sm:$0xff]
  %v26 = vld [vmem:[%s1 + $0x48] sm:$0xff]
  %v27 = vld [vmem:[%s1 + $0x50] sm:$0xff]
  %v28 = vld [vmem:[%s1 + $0x58] sm:$0xff]
  %v29 = vld [vmem:[%s1 + $0x60] sm:$0xff]
  %v30 = vld [vmem:[%s1 + $0x68] sm:$0xff]
  %v31 = vld [vmem:[%s1 + $0x70] sm:$0xff]
  %v32 = vld [vmem:[%s1 + $0x78] sm:$0xff]
  %v33 = vld [vmem:[%s1 + $0x80] sm:$0xff]
  %v34 = vld [vmem:[%s1 + $0x88] sm:$0xff]
  %v35 = vld [vmem:[%s1 + $0x90] sm:$0xff]
  %v36 = vld [vmem:[%s1 + $0x98] sm:$0xff]
  %v37 = vld [vmem:[%s1 + $0xa0] sm:$0xf]
  %v38 = vld [vmem:[%s1 + $0xa8] sm:$0xf]
  %v39 = vld [vmem:[%s0] ss:$2 sm:$0xff]
  %s40 = scalar_lea.vmem %s0, 16
  %v41 = vld [vmem:[%s40] ss:$2 sm:$0x3f]
  %s42 = scalar_lea.vmem %s0, 1
  %v43 = vld [vmem:[%s42] ss:$2 sm:$0xff]
  %s44 = scalar_lea.vmem %s0, 17
  %v45 = vld [vmem:[%s44] ss:$2 sm:$0x3f]
  %s46 = scalar_lea.vmem %s1, 176
  %v47 = vld [vmem:[%s46] sm:$0xff]
  %v48 = vld [vmem:[%s46 + $0x8] sm:$0xff]
  %v49 = vld [vmem:[%s46 + $0x10] sm:$0xff]
  %v50 = vld [vmem:[%s46 + $0x18] sm:$0xff]
  %v51 = vld [vmem:[%s46 + $0x20] sm:$0xff]
  %v52 = vld [vmem:[%s46 + $0x28] sm:$0xff]
  %v53 = vld [vmem:[%s46 + $0x30] sm:$0xff]
  %v54 = vld [vmem:[%s46 + $0x38] sm:$0xff]
  %v55 = vld [vmem:[%s46 + $0x40] sm:$0xff]
  %v56 = vld [vmem:[%s46 + $0x48] sm:$0xff]
  %v57 = vld [vmem:[%s46 + $0x50] sm:$0xff]
  %v58 = vld [vmem:[%s46 + $0x58] sm:$0xff]
  %v59 = vld [vmem:[%s46 + $0x60] sm:$0xff]
  %v60 = vld [vmem:[%s46 + $0x68] sm:$0xff]
  %v61 = vld [vmem:[%s46 + $0x70] sm:$0xff]
  %v62 = vld [vmem:[%s46 + $0x78] sm:$0xff]
  %v63 = vld [vmem:[%s46 + $0x80] sm:$0xff]
  %v64 = vld [vmem:[%s46 + $0x88] sm:$0xff]
  %v65 = vld [vmem:[%s46 + $0x90] sm:$0xff]
  %v66 = vld [vmem:[%s46 + $0x98] sm:$0xff]
  %v67 = vld [vmem:[%s46 + $0xa0] sm:$0xf]
  %v68 = vld [vmem:[%s46 + $0xa8] sm:$0xf]
  %s69 = scalar_lea.vmem %s0, 2
  %v70 = vld [vmem:[%s69] ss:$2 sm:$0xff]
  %s71 = scalar_lea.vmem %s0, 18
  %v72 = vld [vmem:[%s71] ss:$2 sm:$0x3f]
  %vm73 = vcmask 687104
  %v75 = vsel %vm73, %v43, 0
  %v78 = vsel %vm73, %v45, 0
  %vm80 = vcmask 1043456
  %v82 = vsel %vm80, %v67, 0
  %v85 = vsel %vm80, %v68, 0
  %87 = vmatpush.msra.mxu0 0.0
  %88 = vmatpush.msra.mxu0 0.0
  %89 = vmatpush.msra.mxu0 0.0
  %90 = vmatpush.msra.mxu0 0.0
  %91 = vmatpush.msra.mxu0 0.0
  %92 = vmatpush.msra.mxu0 %v82
  %93 = vmatpush.msra.mxu0 %v65
  %94 = vmatpush.msra.mxu0 %v63
  %95 = vmatpush.msra.mxu0 %v61
  %96 = vmatpush.msra.mxu0 %v59
  %97 = vmatpush.msra.mxu0 %v57
  %98 = vmatpush.msra.mxu0 %v55
  %99 = vmatpush.msra.mxu0 %v53
  %100 = vmatpush.msra.mxu0 %v51
  %101 = vmatpush.msra.mxu0 %v49
  %102 = vmatpush.msra.mxu0 %v47
  %103 = vmatmul.f32.gmra.mxu0 %v75
  %v104 = vpop.f32.mrf.mxu0
  %v105 = vadd.f32 0.0, %v104
  %106 = vmatmul.f32.gmra.mxu0 %v78
  %v107 = vpop.f32.mrf.mxu0
  %v108 = vadd.f32 0.0, %v107
  %109 = vdwg.mxu0
  %110 = vmatpush.msra.mxu0 0.0
  %111 = vmatpush.msra.mxu0 0.0
  %112 = vmatpush.msra.mxu0 0.0
  %113 = vmatpush.msra.mxu0 0.0
  %114 = vmatpush.msra.mxu0 0.0
  %115 = vmatpush.msra.mxu0 %v85
  %116 = vmatpush.msra.mxu0 %v66
  %117 = vmatpush.msra.mxu0 %v64
  %118 = vmatpush.msra.mxu0 %v62
  %119 = vmatpush.msra.mxu0 %v60
  %120 = vmatpush.msra.mxu0 %v58
  %121 = vmatpush.msra.mxu0 %v56
  %122 = vmatpush.msra.mxu0 %v54
  %123 = vmatpush.msra.mxu0 %v52
  %124 = vmatpush.msra.mxu0 %v50
  %125 = vmatpush.msra.mxu0 %v48
  %126 = vmatmul.f32.gmra.mxu0 %v75
  %v127 = vpop.f32.mrf.mxu0
  %v128 = vadd.f32 0.0, %v127
  %129 = vmatmul.f32.gmra.mxu0 %v78
  %v130 = vpop.f32.mrf.mxu0
  %v131 = vadd.f32 0.0, %v130
  %132 = vdwg.mxu0
  %v134 = vsel %vm73, %v39, 0
  %v137 = vsel %vm73, %v41, 0
  %v140 = vsel %vm80, %v37, 0
  %v143 = vsel %vm80, %v38, 0
  %145 = vmatpush.msra.mxu0 0.0
  %146 = vmatpush.msra.mxu0 0.0
  %147 = vmatpush.msra.mxu0 0.0
  %148 = vmatpush.msra.mxu0 0.0
  %149 = vmatpush.msra.mxu0 0.0
  %150 = vmatpush.msra.mxu0 %v140
  %151 = vmatpush.msra.mxu0 %v35
  %152 = vmatpush.msra.mxu0 %v33
  %153 = vmatpush.msra.mxu0 %v31
  %154 = vmatpush.msra.mxu0 %v29
  %155 = vmatpush.msra.mxu0 %v27
  %156 = vmatpush.msra.mxu0 %v25
  %157 = vmatpush.msra.mxu0 %v23
  %158 = vmatpush.msra.mxu0 %v21
  %159 = vmatpush.msra.mxu0 %v19
  %160 = vmatpush.msra.mxu0 %v17
  %161 = vmatmul.f32.gmra.mxu0 %v134
  %v162 = vpop.f32.mrf.mxu0
  %v163 = vadd.f32 %v105, %v162
  %164 = vmatmul.f32.gmra.mxu0 %v137
  %v165 = vpop.f32.mrf.mxu0
  %v166 = vadd.f32 %v108, %v165
  %167 = vdwg.mxu0
  %168 = vmatpush.msra.mxu0 0.0
  %169 = vmatpush.msra.mxu0 0.0
  %170 = vmatpush.msra.mxu0 0.0
  %171 = vmatpush.msra.mxu0 0.0
  %172 = vmatpush.msra.mxu0 0.0
  %173 = vmatpush.msra.mxu0 %v143
  %174 = vmatpush.msra.mxu0 %v36
  %175 = vmatpush.msra.mxu0 %v34
  %176 = vmatpush.msra.mxu0 %v32
  %177 = vmatpush.msra.mxu0 %v30
  %178 = vmatpush.msra.mxu0 %v28
  %179 = vmatpush.msra.mxu0 %v26
  %180 = vmatpush.msra.mxu0 %v24
  %181 = vmatpush.msra.mxu0 %v22
  %182 = vmatpush.msra.mxu0 %v20
  %183 = vmatpush.msra.mxu0 %v18
  %184 = vmatmul.f32.gmra.mxu0 %v134
  %v185 = vpop.f32.mrf.mxu0
  %v186 = vadd.f32 %v128, %v185
  %187 = vmatmul.f32.gmra.mxu0 %v137
  %v188 = vpop.f32.mrf.mxu0
  %v189 = vadd.f32 %v131, %v188
  %190 = vdwg.mxu0
  %v192 = vsel %vm73, %v70, 0
  %v195 = vsel %vm73, %v72, 0
  %197 = vmatpush.msra.mxu0 0.0
  %198 = vmatpush.msra.mxu0 0.0
  %199 = vmatpush.msra.mxu0 0.0
  %200 = vmatpush.msra.mxu0 0.0
  %201 = vmatpush.msra.mxu0 0.0
  %202 = vmatpush.msra.mxu0 %v82
  %203 = vmatpush.msra.mxu0 %v65
  %204 = vmatpush.msra.mxu0 %v63
  %205 = vmatpush.msra.mxu0 %v61
  %206 = vmatpush.msra.mxu0 %v59
  %207 = vmatpush.msra.mxu0 %v57
  %208 = vmatpush.msra.mxu0 %v55
  %209 = vmatpush.msra.mxu0 %v53
  %210 = vmatpush.msra.mxu0 %v51
  %211 = vmatpush.msra.mxu0 %v49
  %212 = vmatpush.msra.mxu0 %v47
  %213 = vmatmul.f32.gmra.mxu0 %v192
  %v214 = vpop.f32.mrf.mxu0
  %v215 = vadd.f32 0.0, %v214
  %216 = vmatmul.f32.gmra.mxu0 %v195
  %v217 = vpop.f32.mrf.mxu0
  %v218 = vadd.f32 0.0, %v217
  %219 = vdwg.mxu0
  %220 = vmatpush.msra.mxu0 0.0
  %221 = vmatpush.msra.mxu0 0.0
  %222 = vmatpush.msra.mxu0 0.0
  %223 = vmatpush.msra.mxu0 0.0
  %224 = vmatpush.msra.mxu0 0.0
  %225 = vmatpush.msra.mxu0 %v85
  %226 = vmatpush.msra.mxu0 %v66
  %227 = vmatpush.msra.mxu0 %v64
  %228 = vmatpush.msra.mxu0 %v62
  %229 = vmatpush.msra.mxu0 %v60
  %230 = vmatpush.msra.mxu0 %v58
  %231 = vmatpush.msra.mxu0 %v56
  %232 = vmatpush.msra.mxu0 %v54
  %233 = vmatpush.msra.mxu0 %v52
  %234 = vmatpush.msra.mxu0 %v50
  %235 = vmatpush.msra.mxu0 %v48
  %236 = vmatmul.f32.gmra.mxu0 %v192
  %v237 = vpop.f32.mrf.mxu0
  %v238 = vadd.f32 0.0, %v237
  %239 = vmatmul.f32.gmra.mxu0 %v195
  %v240 = vpop.f32.mrf.mxu0
  %v241 = vadd.f32 0.0, %v240
  %242 = vdwg.mxu0
  %243 = vmatpush.msra.mxu0 0.0
  %244 = vmatpush.msra.mxu0 0.0
  %245 = vmatpush.msra.mxu0 0.0
  %246 = vmatpush.msra.mxu0 0.0
  %247 = vmatpush.msra.mxu0 0.0
  %248 = vmatpush.msra.mxu0 %v140
  %249 = vmatpush.msra.mxu0 %v35
  %250 = vmatpush.msra.mxu0 %v33
  %251 = vmatpush.msra.mxu0 %v31
  %252 = vmatpush.msra.mxu0 %v29
  %253 = vmatpush.msra.mxu0 %v27
  %254 = vmatpush.msra.mxu0 %v25
  %255 = vmatpush.msra.mxu0 %v23
  %256 = vmatpush.msra.mxu0 %v21
  %257 = vmatpush.msra.mxu0 %v19
  %258 = vmatpush.msra.mxu0 %v17
  %259 = vmatmul.f32.gmra.mxu0 %v75
  %v260 = vpop.f32.mrf.mxu0
  %v261 = vadd.f32 %v215, %v260
  %262 = vmatmul.f32.gmra.mxu0 %v78
  %v263 = vpop.f32.mrf.mxu0
  %v264 = vadd.f32 %v218, %v263
  %265 = vdwg.mxu0
  %266 = vmatpush.msra.mxu0 0.0
  %267 = vmatpush.msra.mxu0 0.0
  %268 = vmatpush.msra.mxu0 0.0
  %269 = vmatpush.msra.mxu0 0.0
  %270 = vmatpush.msra.mxu0 0.0
  %271 = vmatpush.msra.mxu0 %v143
  %272 = vmatpush.msra.mxu0 %v36
  %273 = vmatpush.msra.mxu0 %v34
  %274 = vmatpush.msra.mxu0 %v32
  %275 = vmatpush.msra.mxu0 %v30
  %276 = vmatpush.msra.mxu0 %v28
  %277 = vmatpush.msra.mxu0 %v26
  %278 = vmatpush.msra.mxu0 %v24
  %279 = vmatpush.msra.mxu0 %v22
  %280 = vmatpush.msra.mxu0 %v20
  %281 = vmatpush.msra.mxu0 %v18
  %282 = vmatmul.f32.gmra.mxu0 %v75
  %v283 = vpop.f32.mrf.mxu0
  %v284 = vadd.f32 %v238, %v283
  %285 = vmatmul.f32.gmra.mxu0 %v78
  %v286 = vpop.f32.mrf.mxu0
  %v287 = vadd.f32 %v241, %v286
  %288 = vdwg.mxu0
  %s289 = scalar_lea.vmem %s1, 352
  %v290 = vld [vmem:[%s289] sm:$0xff]
  %v291 = vld [vmem:[%s289 + $0x8] sm:$0xff]
  %v292 = vld [vmem:[%s289 + $0x10] sm:$0xff]
  %v293 = vld [vmem:[%s289 + $0x18] sm:$0xff]
  %v294 = vld [vmem:[%s289 + $0x20] sm:$0xff]
  %v295 = vld [vmem:[%s289 + $0x28] sm:$0xff]
  %v296 = vld [vmem:[%s289 + $0x30] sm:$0xff]
  %v297 = vld [vmem:[%s289 + $0x38] sm:$0xff]
  %v298 = vld [vmem:[%s289 + $0x40] sm:$0xff]
  %v299 = vld [vmem:[%s289 + $0x48] sm:$0xff]
  %v300 = vld [vmem:[%s289 + $0x50] sm:$0xff]
  %v301 = vld [vmem:[%s289 + $0x58] sm:$0xff]
  %v302 = vld [vmem:[%s289 + $0x60] sm:$0xff]
  %v303 = vld [vmem:[%s289 + $0x68] sm:$0xff]
  %v304 = vld [vmem:[%s289 + $0x70] sm:$0xff]
  %v305 = vld [vmem:[%s289 + $0x78] sm:$0xff]
  %v306 = vld [vmem:[%s289 + $0x80] sm:$0xff]
  %v307 = vld [vmem:[%s289 + $0x88] sm:$0xff]
  %v308 = vld [vmem:[%s289 + $0x90] sm:$0xff]
  %v309 = vld [vmem:[%s289 + $0x98] sm:$0xff]
  %v310 = vld [vmem:[%s289 + $0xa0] sm:$0xf]
  %v311 = vld [vmem:[%s289 + $0xa8] sm:$0xf]
  %s312 = scalar_lea.vmem %s0, 3
  %v313 = vld [vmem:[%s312] ss:$2 sm:$0xff]
  %s314 = scalar_lea.vmem %s0, 19
  %v315 = vld [vmem:[%s314] ss:$2 sm:$0x3f]
  %v317 = vsel %vm80, %v310, 0
  %v320 = vsel %vm80, %v311, 0
  %322 = vmatpush.msra.mxu0 0.0
  %323 = vmatpush.msra.mxu0 0.0
  %324 = vmatpush.msra.mxu0 0.0
  %325 = vmatpush.msra.mxu0 0.0
  %326 = vmatpush.msra.mxu0 0.0
  %327 = vmatpush.msra.mxu0 %v317
  %328 = vmatpush.msra.mxu0 %v308
  %329 = vmatpush.msra.mxu0 %v306
  %330 = vmatpush.msra.mxu0 %v304
  %331 = vmatpush.msra.mxu0 %v302
  %332 = vmatpush.msra.mxu0 %v300
  %333 = vmatpush.msra.mxu0 %v298
  %334 = vmatpush.msra.mxu0 %v296
  %335 = vmatpush.msra.mxu0 %v294
  %336 = vmatpush.msra.mxu0 %v292
  %337 = vmatpush.msra.mxu0 %v290
  %338 = vmatmul.f32.gmra.mxu0 %v192
  %v339 = vpop.f32.mrf.mxu0
  %v340 = vadd.f32 0.0, %v339
  %341 = vmatmul.f32.gmra.mxu0 %v195
  %v342 = vpop.f32.mrf.mxu0
  %v343 = vadd.f32 0.0, %v342
  %344 = vdwg.mxu0
  %345 = vmatpush.msra.mxu0 0.0
  %346 = vmatpush.msra.mxu0 0.0
  %347 = vmatpush.msra.mxu0 0.0
  %348 = vmatpush.msra.mxu0 0.0
  %349 = vmatpush.msra.mxu0 0.0
  %350 = vmatpush.msra.mxu0 %v320
  %351 = vmatpush.msra.mxu0 %v309
  %352 = vmatpush.msra.mxu0 %v307
  %353 = vmatpush.msra.mxu0 %v305
  %354 = vmatpush.msra.mxu0 %v303
  %355 = vmatpush.msra.mxu0 %v301
  %356 = vmatpush.msra.mxu0 %v299
  %357 = vmatpush.msra.mxu0 %v297
  %358 = vmatpush.msra.mxu0 %v295
  %359 = vmatpush.msra.mxu0 %v293
  %360 = vmatpush.msra.mxu0 %v291
  %361 = vmatmul.f32.gmra.mxu0 %v192
  %v362 = vpop.f32.mrf.mxu0
  %v363 = vadd.f32 0.0, %v362
  %364 = vmatmul.f32.gmra.mxu0 %v195
  %v365 = vpop.f32.mrf.mxu0
  %v366 = vadd.f32 0.0, %v365
  %367 = vdwg.mxu0
  %v368 = vadd.f32 %v163, %v340
  %v369 = vadd.f32 %v186, %v363
  %v370 = vadd.f32 %v166, %v343
  %v371 = vadd.f32 %v189, %v366
  %v373 = vsel %vm73, %v313, 0
  %v376 = vsel %vm73, %v315, 0
  %378 = vmatpush.msra.mxu0 0.0
  %379 = vmatpush.msra.mxu0 0.0
  %380 = vmatpush.msra.mxu0 0.0
  %381 = vmatpush.msra.mxu0 0.0
  %382 = vmatpush.msra.mxu0 0.0
  %383 = vmatpush.msra.mxu0 %v317
  %384 = vmatpush.msra.mxu0 %v308
  %385 = vmatpush.msra.mxu0 %v306
  %386 = vmatpush.msra.mxu0 %v304
  %387 = vmatpush.msra.mxu0 %v302
  %388 = vmatpush.msra.mxu0 %v300
  %389 = vmatpush.msra.mxu0 %v298
  %390 = vmatpush.msra.mxu0 %v296
  %391 = vmatpush.msra.mxu0 %v294
  %392 = vmatpush.msra.mxu0 %v292
  %393 = vmatpush.msra.mxu0 %v290
  %394 = vmatmul.f32.gmra.mxu0 %v373
  %v395 = vpop.f32.mrf.mxu0
  %v396 = vadd.f32 0.0, %v395
  %397 = vmatmul.f32.gmra.mxu0 %v376
  %v398 = vpop.f32.mrf.mxu0
  %v399 = vadd.f32 0.0, %v398
  %400 = vdwg.mxu0
  %401 = vmatpush.msra.mxu0 0.0
  %402 = vmatpush.msra.mxu0 0.0
  %403 = vmatpush.msra.mxu0 0.0
  %404 = vmatpush.msra.mxu0 0.0
  %405 = vmatpush.msra.mxu0 0.0
  %406 = vmatpush.msra.mxu0 %v320
  %407 = vmatpush.msra.mxu0 %v309
  %408 = vmatpush.msra.mxu0 %v307
  %409 = vmatpush.msra.mxu0 %v305
  %410 = vmatpush.msra.mxu0 %v303
  %411 = vmatpush.msra.mxu0 %v301
  %412 = vmatpush.msra.mxu0 %v299
  %413 = vmatpush.msra.mxu0 %v297
  %414 = vmatpush.msra.mxu0 %v295
  %415 = vmatpush.msra.mxu0 %v293
  %416 = vmatpush.msra.mxu0 %v291
  %417 = vmatmul.f32.gmra.mxu0 %v373
  %v418 = vpop.f32.mrf.mxu0
  %v419 = vadd.f32 0.0, %v418
  %420 = vmatmul.f32.gmra.mxu0 %v376
  %v421 = vpop.f32.mrf.mxu0
  %v422 = vadd.f32 0.0, %v421
  %423 = vdwg.mxu0
  %v424 = vadd.f32 %v261, %v396
  %v425 = vadd.f32 %v284, %v419
  %v426 = vadd.f32 %v264, %v399
  %v427 = vadd.f32 %v287, %v422
  %s428 = scalar_lea.vmem %s1, 528
  %v429 = vld [vmem:[%s428] sm:$0xff]
  %v430 = vld [vmem:[%s428 + $0x8] sm:$0xff]
  %v431 = vld [vmem:[%s428 + $0x10] sm:$0xff]
  %v432 = vld [vmem:[%s428 + $0x18] sm:$0xff]
  %v433 = vld [vmem:[%s428 + $0x20] sm:$0xff]
  %v434 = vld [vmem:[%s428 + $0x28] sm:$0xff]
  %v435 = vld [vmem:[%s428 + $0x30] sm:$0xff]
  %v436 = vld [vmem:[%s428 + $0x38] sm:$0xff]
  %v437 = vld [vmem:[%s428 + $0x40] sm:$0xff]
  %v438 = vld [vmem:[%s428 + $0x48] sm:$0xff]
  %v439 = vld [vmem:[%s428 + $0x50] sm:$0xff]
  %v440 = vld [vmem:[%s428 + $0x58] sm:$0xff]
  %v441 = vld [vmem:[%s428 + $0x60] sm:$0xff]
  %v442 = vld [vmem:[%s428 + $0x68] sm:$0xff]
  %v443 = vld [vmem:[%s428 + $0x70] sm:$0xff]
  %v444 = vld [vmem:[%s428 + $0x78] sm:$0xff]
  %v445 = vld [vmem:[%s428 + $0x80] sm:$0xff]
  %v446 = vld [vmem:[%s428 + $0x88] sm:$0xff]
  %v447 = vld [vmem:[%s428 + $0x90] sm:$0xff]
  %v448 = vld [vmem:[%s428 + $0x98] sm:$0xff]
  %v449 = vld [vmem:[%s428 + $0xa0] sm:$0xf]
  %v450 = vld [vmem:[%s428 + $0xa8] sm:$0xf]
  %s451 = scalar_lea.vmem %s0, 4
  %v452 = vld [vmem:[%s451] ss:$2 sm:$0xff]
  %s453 = scalar_lea.vmem %s0, 20
  %v454 = vld [vmem:[%s453] ss:$2 sm:$0x3f]
  %v456 = vsel %vm80, %v449, 0
  %v459 = vsel %vm80, %v450, 0
  %461 = vmatpush.msra.mxu0 0.0
  %462 = vmatpush.msra.mxu0 0.0
  %463 = vmatpush.msra.mxu0 0.0
  %464 = vmatpush.msra.mxu0 0.0
  %465 = vmatpush.msra.mxu0 0.0
  %466 = vmatpush.msra.mxu0 %v456
  %467 = vmatpush.msra.mxu0 %v447
  %468 = vmatpush.msra.mxu0 %v445
  %469 = vmatpush.msra.mxu0 %v443
  %470 = vmatpush.msra.mxu0 %v441
  %471 = vmatpush.msra.mxu0 %v439
  %472 = vmatpush.msra.mxu0 %v437
  %473 = vmatpush.msra.mxu0 %v435
  %474 = vmatpush.msra.mxu0 %v433
  %475 = vmatpush.msra.mxu0 %v431
  %476 = vmatpush.msra.mxu0 %v429
  %477 = vmatmul.f32.gmra.mxu0 %v373
  %v478 = vpop.f32.mrf.mxu0
  %v479 = vadd.f32 0.0, %v478
  %480 = vmatmul.f32.gmra.mxu0 %v376
  %v481 = vpop.f32.mrf.mxu0
  %v482 = vadd.f32 0.0, %v481
  %483 = vdwg.mxu0
  %484 = vmatpush.msra.mxu0 0.0
  %485 = vmatpush.msra.mxu0 0.0
  %486 = vmatpush.msra.mxu0 0.0
  %487 = vmatpush.msra.mxu0 0.0
  %488 = vmatpush.msra.mxu0 0.0
  %489 = vmatpush.msra.mxu0 %v459
  %490 = vmatpush.msra.mxu0 %v448
  %491 = vmatpush.msra.mxu0 %v446
  %492 = vmatpush.msra.mxu0 %v444
  %493 = vmatpush.msra.mxu0 %v442
  %494 = vmatpush.msra.mxu0 %v440
  %495 = vmatpush.msra.mxu0 %v438
  %496 = vmatpush.msra.mxu0 %v436
  %497 = vmatpush.msra.mxu0 %v434
  %498 = vmatpush.msra.mxu0 %v432
  %499 = vmatpush.msra.mxu0 %v430
  %500 = vmatmul.f32.gmra.mxu0 %v373
  %v501 = vpop.f32.mrf.mxu0
  %v502 = vadd.f32 0.0, %v501
  %503 = vmatmul.f32.gmra.mxu0 %v376
  %v504 = vpop.f32.mrf.mxu0
  %v505 = vadd.f32 0.0, %v504
  %506 = vdwg.mxu0
  %v507 = vadd.f32 %v368, %v479
  %v508 = vadd.f32 %v369, %v502
  %v509 = vadd.f32 %v370, %v482
  %v510 = vadd.f32 %v371, %v505
  %v512 = vsel %vm73, %v452, 0
  %v515 = vsel %vm73, %v454, 0
  %517 = vmatpush.msra.mxu0 0.0
  %518 = vmatpush.msra.mxu0 0.0
  %519 = vmatpush.msra.mxu0 0.0
  %520 = vmatpush.msra.mxu0 0.0
  %521 = vmatpush.msra.mxu0 0.0
  %522 = vmatpush.msra.mxu0 %v456
  %523 = vmatpush.msra.mxu0 %v447
  %524 = vmatpush.msra.mxu0 %v445
  %525 = vmatpush.msra.mxu0 %v443
  %526 = vmatpush.msra.mxu0 %v441
  %527 = vmatpush.msra.mxu0 %v439
  %528 = vmatpush.msra.mxu0 %v437
  %529 = vmatpush.msra.mxu0 %v435
  %530 = vmatpush.msra.mxu0 %v433
  %531 = vmatpush.msra.mxu0 %v431
  %532 = vmatpush.msra.mxu0 %v429
  %533 = vmatmul.f32.gmra.mxu0 %v512
  %v534 = vpop.f32.mrf.mxu0
  %v535 = vadd.f32 0.0, %v534
  %536 = vmatmul.f32.gmra.mxu0 %v515
  %v537 = vpop.f32.mrf.mxu0
  %v538 = vadd.f32 0.0, %v537
  %539 = vdwg.mxu0
  %540 = vmatpush.msra.mxu0 0.0
  %541 = vmatpush.msra.mxu0 0.0
  %542 = vmatpush.msra.mxu0 0.0
  %543 = vmatpush.msra.mxu0 0.0
  %544 = vmatpush.msra.mxu0 0.0
  %545 = vmatpush.msra.mxu0 %v459
  %546 = vmatpush.msra.mxu0 %v448
  %547 = vmatpush.msra.mxu0 %v446
  %548 = vmatpush.msra.mxu0 %v444
  %549 = vmatpush.msra.mxu0 %v442
  %550 = vmatpush.msra.mxu0 %v440
  %551 = vmatpush.msra.mxu0 %v438
  %552 = vmatpush.msra.mxu0 %v436
  %553 = vmatpush.msra.mxu0 %v434
  %554 = vmatpush.msra.mxu0 %v432
  %555 = vmatpush.msra.mxu0 %v430
  %556 = vmatmul.f32.gmra.mxu0 %v512
  %v557 = vpop.f32.mrf.mxu0
  %v558 = vadd.f32 0.0, %v557
  %559 = vmatmul.f32.gmra.mxu0 %v515
  %v560 = vpop.f32.mrf.mxu0
  %v561 = vadd.f32 0.0, %v560
  %562 = vdwg.mxu0
  %v563 = vadd.f32 %v424, %v535
  %v564 = vadd.f32 %v425, %v558
  %v565 = vadd.f32 %v426, %v538
  %v566 = vadd.f32 %v427, %v561
  %s567 = scalar_lea.vmem %s1, 704
  %v568 = vld [vmem:[%s567] sm:$0xff]
  %v569 = vld [vmem:[%s567 + $0x8] sm:$0xff]
  %v570 = vld [vmem:[%s567 + $0x10] sm:$0xff]
  %v571 = vld [vmem:[%s567 + $0x18] sm:$0xff]
  %v572 = vld [vmem:[%s567 + $0x20] sm:$0xff]
  %v573 = vld [vmem:[%s567 + $0x28] sm:$0xff]
  %v574 = vld [vmem:[%s567 + $0x30] sm:$0xff]
  %v575 = vld [vmem:[%s567 + $0x38] sm:$0xff]
  %v576 = vld [vmem:[%s567 + $0x40] sm:$0xff]
  %v577 = vld [vmem:[%s567 + $0x48] sm:$0xff]
  %v578 = vld [vmem:[%s567 + $0x50] sm:$0xff]
  %v579 = vld [vmem:[%s567 + $0x58] sm:$0xff]
  %v580 = vld [vmem:[%s567 + $0x60] sm:$0xff]
  %v581 = vld [vmem:[%s567 + $0x68] sm:$0xff]
  %v582 = vld [vmem:[%s567 + $0x70] sm:$0xff]
  %v583 = vld [vmem:[%s567 + $0x78] sm:$0xff]
  %v584 = vld [vmem:[%s567 + $0x80] sm:$0xff]
  %v585 = vld [vmem:[%s567 + $0x88] sm:$0xff]
  %v586 = vld [vmem:[%s567 + $0x90] sm:$0xff]
  %v587 = vld [vmem:[%s567 + $0x98] sm:$0xff]
  %v588 = vld [vmem:[%s567 + $0xa0] sm:$0xf]
  %v589 = vld [vmem:[%s567 + $0xa8] sm:$0xf]
  %s590 = scalar_lea.vmem %s0, 5
  %v591 = vld [vmem:[%s590] ss:$2 sm:$0xff]
  %s592 = scalar_lea.vmem %s0, 21
  %v593 = vld [vmem:[%s592] ss:$2 sm:$0x3f]
  %v595 = vsel %vm80, %v588, 0
  %v598 = vsel %vm80, %v589, 0
  %600 = vmatpush.msra.mxu0 0.0
  %601 = vmatpush.msra.mxu0 0.0
  %602 = vmatpush.msra.mxu0 0.0
  %603 = vmatpush.msra.mxu0 0.0
  %604 = vmatpush.msra.mxu0 0.0
  %605 = vmatpush.msra.mxu0 %v595
  %606 = vmatpush.msra.mxu0 %v586
  %607 = vmatpush.msra.mxu0 %v584
  %608 = vmatpush.msra.mxu0 %v582
  %609 = vmatpush.msra.mxu0 %v580
  %610 = vmatpush.msra.mxu0 %v578
  %611 = vmatpush.msra.mxu0 %v576
  %612 = vmatpush.msra.mxu0 %v574
  %613 = vmatpush.msra.mxu0 %v572
  %614 = vmatpush.msra.mxu0 %v570
  %615 = vmatpush.msra.mxu0 %v568
  %616 = vmatmul.f32.gmra.mxu0 %v512
  %v617 = vpop.f32.mrf.mxu0
  %v618 = vadd.f32 0.0, %v617
  %619 = vmatmul.f32.gmra.mxu0 %v515
  %v620 = vpop.f32.mrf.mxu0
  %v621 = vadd.f32 0.0, %v620
  %622 = vdwg.mxu0
  %623 = vmatpush.msra.mxu0 0.0
  %624 = vmatpush.msra.mxu0 0.0
  %625 = vmatpush.msra.mxu0 0.0
  %626 = vmatpush.msra.mxu0 0.0
  %627 = vmatpush.msra.mxu0 0.0
  %628 = vmatpush.msra.mxu0 %v598
  %629 = vmatpush.msra.mxu0 %v587
  %630 = vmatpush.msra.mxu0 %v585
  %631 = vmatpush.msra.mxu0 %v583
  %632 = vmatpush.msra.mxu0 %v581
  %633 = vmatpush.msra.mxu0 %v579
  %634 = vmatpush.msra.mxu0 %v577
  %635 = vmatpush.msra.mxu0 %v575
  %636 = vmatpush.msra.mxu0 %v573
  %637 = vmatpush.msra.mxu0 %v571
  %638 = vmatpush.msra.mxu0 %v569
  %639 = vmatmul.f32.gmra.mxu0 %v512
  %v640 = vpop.f32.mrf.mxu0
  %v641 = vadd.f32 0.0, %v640
  %642 = vmatmul.f32.gmra.mxu0 %v515
  %v643 = vpop.f32.mrf.mxu0
  %v644 = vadd.f32 0.0, %v643
  %645 = vdwg.mxu0
  %v646 = vadd.f32 %v507, %v618
  %v647 = vadd.f32 %v508, %v641
  %v648 = vadd.f32 %v509, %v621
  %v649 = vadd.f32 %v510, %v644
  %v651 = vsel %vm73, %v591, 0
  %v654 = vsel %vm73, %v593, 0
  %656 = vmatpush.msra.mxu0 0.0
  %657 = vmatpush.msra.mxu0 0.0
  %658 = vmatpush.msra.mxu0 0.0
  %659 = vmatpush.msra.mxu0 0.0
  %660 = vmatpush.msra.mxu0 0.0
  %661 = vmatpush.msra.mxu0 %v595
  %662 = vmatpush.msra.mxu0 %v586
  %663 = vmatpush.msra.mxu0 %v584
  %664 = vmatpush.msra.mxu0 %v582
  %665 = vmatpush.msra.mxu0 %v580
  %666 = vmatpush.msra.mxu0 %v578
  %667 = vmatpush.msra.mxu0 %v576
  %668 = vmatpush.msra.mxu0 %v574
  %669 = vmatpush.msra.mxu0 %v572
  %670 = vmatpush.msra.mxu0 %v570
  %671 = vmatpush.msra.mxu0 %v568
  %672 = vmatmul.f32.gmra.mxu0 %v651
  %v673 = vpop.f32.mrf.mxu0
  %v674 = vadd.f32 0.0, %v673
  %675 = vmatmul.f32.gmra.mxu0 %v654
  %v676 = vpop.f32.mrf.mxu0
  %v677 = vadd.f32 0.0, %v676
  %678 = vdwg.mxu0
  %679 = vmatpush.msra.mxu0 0.0
  %680 = vmatpush.msra.mxu0 0.0
  %681 = vmatpush.msra.mxu0 0.0
  %682 = vmatpush.msra.mxu0 0.0
  %683 = vmatpush.msra.mxu0 0.0
  %684 = vmatpush.msra.mxu0 %v598
  %685 = vmatpush.msra.mxu0 %v587
  %686 = vmatpush.msra.mxu0 %v585
  %687 = vmatpush.msra.mxu0 %v583
  %688 = vmatpush.msra.mxu0 %v581
  %689 = vmatpush.msra.mxu0 %v579
  %690 = vmatpush.msra.mxu0 %v577
  %691 = vmatpush.msra.mxu0 %v575
  %692 = vmatpush.msra.mxu0 %v573
  %693 = vmatpush.msra.mxu0 %v571
  %694 = vmatpush.msra.mxu0 %v569
  %695 = vmatmul.f32.gmra.mxu0 %v651
  %v696 = vpop.f32.mrf.mxu0
  %v697 = vadd.f32 0.0, %v696
  %698 = vmatmul.f32.gmra.mxu0 %v654
  %v699 = vpop.f32.mrf.mxu0
  %v700 = vadd.f32 0.0, %v699
  %701 = vdwg.mxu0
  %v702 = vadd.f32 %v563, %v674
  %v703 = vadd.f32 %v564, %v697
  %v704 = vadd.f32 %v565, %v677
  %v705 = vadd.f32 %v566, %v700
  %v706 = vld [vmem:[%s2] sm:$0x3]
  %v708 = vperm.slane %v706, 0
  %v709 = vperm.slane %v706, 1
  %v712 = vadd.f32 %v646, %v708
  %v713 = vadd.f32 %v647, %v709
  %v714 = vadd.f32 %v648, %v708
  %v715 = vadd.f32 %v649, %v709
  %v716 = vtanh.pop %v712
  %v717 = vtanh.pop %v713
  %v718 = vtanh.pop %v714
  %v719 = vtanh.pop %v715
  %v720 = vadd.f32 %v702, %v708
  %v721 = vadd.f32 %v703, %v709
  %v722 = vadd.f32 %v704, %v708
  %v723 = vadd.f32 %v705, %v709
  %v724 = vtanh.pop %v720
  %v725 = vtanh.pop %v721
  %v726 = vtanh.pop %v722
  %v727 = vtanh.pop %v723
  %v728 = vadd.f32 %v716, %v724
  %v729 = vadd.f32 %v717, %v725
  %v730 = vadd.f32 %v718, %v726
  %v731 = vadd.f32 %v719, %v727
  %v732 = vmul.f32 %v728, 0.5
  %v733 = vmul.f32 %v729, 0.5
  %v734 = vmul.f32 %v730, 0.5
  %v735 = vmul.f32 %v731, 0.5
  %v736 = vld [vmem:[%s3] sm:$0xff]
  %v737 = vld [vmem:[%s3 + $0x8] sm:$0xff]
  %v738 = vld [vmem:[%s3 + $0x10] sm:$0xff]
  %v739 = vld [vmem:[%s3 + $0x18] sm:$0xff]
  %v740 = vld [vmem:[%s3 + $0x20] sm:$0xff]
  %v741 = vld [vmem:[%s3 + $0x28] sm:$0xff]
  %v742 = vld [vmem:[%s3 + $0x30] sm:$0xff]
  %v743 = vld [vmem:[%s3 + $0x38] sm:$0xff]
  %v744 = vld [vmem:[%s3 + $0x40] sm:$0xff]
  %v745 = vld [vmem:[%s3 + $0x48] sm:$0xff]
  %v746 = vld [vmem:[%s3 + $0x50] sm:$0xff]
  %v747 = vld [vmem:[%s3 + $0x58] sm:$0xff]
  %v748 = vld [vmem:[%s3 + $0x60] sm:$0xff]
  %v749 = vld [vmem:[%s3 + $0x68] sm:$0xff]
  %v750 = vld [vmem:[%s3 + $0x70] sm:$0xff]
  %v751 = vld [vmem:[%s3 + $0x78] sm:$0xff]
  %v752 = vld [vmem:[%s3 + $0x80] sm:$0xff]
  %v753 = vld [vmem:[%s3 + $0x88] sm:$0xff]
  %v754 = vld [vmem:[%s3 + $0x90] sm:$0xff]
  %v755 = vld [vmem:[%s3 + $0x98] sm:$0xff]
  %vm756 = vcmask 261120
  %v758 = vsel %vm756, %v733, 0
  %v761 = vsel %vm756, %v735, 0
  %763 = vmatpush.msra.mxu0 %v751
  %764 = vmatpush.msra.mxu0 %v750
  %765 = vmatpush.msra.mxu0 %v749
  %766 = vmatpush.msra.mxu0 %v748
  %767 = vmatpush.msra.mxu0 %v747
  %768 = vmatpush.msra.mxu0 %v746
  %769 = vmatpush.msra.mxu0 %v745
  %770 = vmatpush.msra.mxu0 %v744
  %771 = vmatpush.msra.mxu0 %v743
  %772 = vmatpush.msra.mxu0 %v742
  %773 = vmatpush.msra.mxu0 %v741
  %774 = vmatpush.msra.mxu0 %v740
  %775 = vmatpush.msra.mxu0 %v739
  %776 = vmatpush.msra.mxu0 %v738
  %777 = vmatpush.msra.mxu0 %v737
  %778 = vmatpush.msra.mxu0 %v736
  %779 = vmatmul.f32.gmra.mxu0 %v732
  %v780 = vpop.f32.mrf.mxu0
  %v781 = vadd.f32 0.0, %v780
  %782 = vmatmul.f32.gmra.mxu0 %v734
  %v783 = vpop.f32.mrf.mxu0
  %v784 = vadd.f32 0.0, %v783
  %785 = vdwg.mxu0
  %786 = vmatpush.msra.mxu0 0.0
  %787 = vmatpush.msra.mxu0 0.0
  %788 = vmatpush.msra.mxu0 0.0
  %789 = vmatpush.msra.mxu0 0.0
  %790 = vmatpush.msra.mxu0 0.0
  %791 = vmatpush.msra.mxu0 0.0
  %792 = vmatpush.msra.mxu0 0.0
  %793 = vmatpush.msra.mxu0 0.0
  %794 = vmatpush.msra.mxu0 0.0
  %795 = vmatpush.msra.mxu0 0.0
  %796 = vmatpush.msra.mxu0 0.0
  %797 = vmatpush.msra.mxu0 0.0
  %798 = vmatpush.msra.mxu0 %v755
  %799 = vmatpush.msra.mxu0 %v754
  %800 = vmatpush.msra.mxu0 %v753
  %801 = vmatpush.msra.mxu0 %v752
  %802 = vmatmul.f32.gmra.mxu0 %v758
  %v803 = vpop.f32.mrf.mxu0
  %v804 = vadd.f32 %v781, %v803
  %805 = vmatmul.f32.gmra.mxu0 %v761
  %v806 = vpop.f32.mrf.mxu0
  %v807 = vadd.f32 %v784, %v806
  %808 = vdwg.mxu0
  %vm809 = vcmask 654336
  %810 = vst.msk [vmem:[%s4] sm:$0xff] %vm809, %v804
  %vm811 = vcmask 652288
  %812 = vst.msk [vmem:[%s4 + $0x8] sm:$0x3f] %vm811, %v807
  %vm813 = vcmask 648192
  %814 = vst.msk [vmem:[%s4 + $0xe] sm:$0x3] %vm813, 0.0
  // Predicated region
  $region18: #{gm_images_net_forward.4} parent=0 // pred_check
    _
  $region19: #{gm_images_net_forward.4} parent=0 // pred_check_branch
    %816 = sbr.rel (0) target = $region21
  $region20: #{gm_images_net_forward.4} parent=0 // pred_region
    _
  $region21: #{gm_images_net_forward.4} parent=0 // pred_fallthru
    _
  // Predicated region
  $region22: #{gm_images_net_forward.4} parent=0 // pred_check
    _
  $region23: #{gm_images_net_forward.4} parent=0 // pred_check_branch
    %818 = sbr.rel (0) target = $region25
  $region24: #{gm_images_net_forward.4} parent=0 // pred_region
    _
  $region25: #{gm_images_net_forward.4} parent=0 // pred_fallthru
    _

// kernel: gm_images_net_forward.3
$region0: #{gm_images_net_forward.3}
  #allocation0 [shape = 'u32[]', space=smem, size = 0x4, offset = 0x4, fixed_abs, tag = 'smem constant byte address 0x4 - core index']
  #allocation1 [shape = 'u32[72,128]{1,0:T(1,128)}', space=vmem, size = 0x9000, scoped, tag = 'internal scratch']
  %s0 = inlined_call_operand.vmem [shape: f32[64,96], index: 0, kind: input, shape index: {}]
  %s1 = inlined_call_operand.vmem [shape: f32[5,96,168], index: 1, kind: input, shape index: {}]
  %s2 = inlined_call_operand.vmem [shape: f32[1,168], index: 2, kind: input, shape index: {}]
  %s3 = inlined_call_operand.vmem [shape: f32[168,84], index: 3, kind: input, shape index: {}]
  %s4 = inlined_call_operand.vmem [shape: f32[32,84], index: 4, kind: output, shape index: {}]
  %s5 = sld [smem:[#allocation0]]
  $region26: #{gm_images_net_forward.3} parent=0
    _
  %s7 = ssub.s32 1, %s5
  %s8 = scalar_select 0, %s7, %s5
  // Predicated region
  $region2: #{gm_images_net_forward.3} parent=0 // pred_check
    _
  $region3: #{gm_images_net_forward.3} parent=0 // pred_check_branch
    %10 = sbr.rel (0) target = $region5
  $region4: #{gm_images_net_forward.3} parent=0 // pred_region
    _
  $region5: #{gm_images_net_forward.3} parent=0 // pred_fallthru
    _
  // Predicated region
  $region6: #{gm_images_net_forward.3} parent=0 // pred_check
    _
  $region7: #{gm_images_net_forward.3} parent=0 // pred_check_branch
    %12 = sbr.rel (0) target = $region9
  $region8: #{gm_images_net_forward.3} parent=0 // pred_region
    _
  $region9: #{gm_images_net_forward.3} parent=0 // pred_fallthru
    _
  // Predicated region
  $region10: #{gm_images_net_forward.3} parent=0 // pred_check
    _
  $region11: #{gm_images_net_forward.3} parent=0 // pred_check_branch
    %14 = sbr.rel (0) target = $region13
  $region12: #{gm_images_net_forward.3} parent=0 // pred_region
    _
  $region13: #{gm_images_net_forward.3} parent=0 // pred_fallthru
    _
  // Predicated region
  $region14: #{gm_images_net_forward.3} parent=0 // pred_check
    _
  $region15: #{gm_images_net_forward.3} parent=0 // pred_check_branch
    %16 = sbr.rel (0) target = $region17
  $region16: #{gm_images_net_forward.3} parent=0 // pred_region
    _
  $region17: #{gm_images_net_forward.3} parent=0 // pred_fallthru
    _
  %v17 = vld [vmem:[%s1] sm:$0xff]
  %v18 = vld [vmem:[%s1 + $0x8] sm:$0xff]
  %v19 = vld [vmem:[%s1 + $0x10] sm:$0xff]
  %v20 = vld [vmem:[%s1 + $0x18] sm:$0xff]
  %v21 = vld [vmem:[%s1 + $0x20] sm:$0xff]
  %v22 = vld [vmem:[%s1 + $0x28] sm:$0xff]
  %v23 = vld [vmem:[%s1 + $0x30] sm:$0xff]
  %v24 = vld [vmem:[%s1 + $0x38] sm:$0xff]
  %v25 = vld [vmem:[%s1 + $0x40] sm:$0xff]
  %v26 = vld [vmem:[%s1 + $0x48] sm:$0xff]
  %v27 = vld [vmem:[%s1 + $0x50] sm:$0xff]
  %v28 = vld [vmem:[%s1 + $0x58] sm:$0xff]
  %v29 = vld [vmem:[%s1 + $0x60] sm:$0xff]
  %v30 = vld [vmem:[%s1 + $0x68] sm:$0xff]
  %v31 = vld [vmem:[%s1 + $0x70] sm:$0xff]
  %v32 = vld [vmem:[%s1 + $0x78] sm:$0xff]
  %v33 = vld [vmem:[%s1 + $0x80] sm:$0xff]
  %v34 = vld [vmem:[%s1 + $0x88] sm:$0xff]
  %v35 = vld [vmem:[%s1 + $0x90] sm:$0xff]
  %v36 = vld [vmem:[%s1 + $0x98] sm:$0xff]
  %v37 = vld [vmem:[%s1 + $0xa0] sm:$0xff]
  %v38 = vld [vmem:[%s1 + $0xa8] sm:$0xff]
  %v39 = vld [vmem:[%s1 + $0xb0] sm:$0xff]
  %v40 = vld [vmem:[%s1 + $0xb8] sm:$0xff]
  %v41 = vld [vmem:[%s0] ss:$2 sm:$0xff]
  %s42 = scalar_lea.vmem %s0, 16
  %v43 = vld [vmem:[%s42] ss:$2 sm:$0xff]
  %s44 = scalar_lea.vmem %s0, 32
  %v45 = vld [vmem:[%s44] ss:$2 sm:$0xff]
  %s46 = scalar_lea.vmem %s0, 48
  %v47 = vld [vmem:[%s46] ss:$2 sm:$0x3f]
  %s48 = scalar_lea.vmem %s0, 1
  %v49 = vld [vmem:[%s48] ss:$2 sm:$0xff]
  %s50 = scalar_lea.vmem %s0, 17
  %v51 = vld [vmem:[%s50] ss:$2 sm:$0xff]
  %s52 = scalar_lea.vmem %s0, 33
  %v53 = vld [vmem:[%s52] ss:$2 sm:$0xff]
  %s54 = scalar_lea.vmem %s0, 49
  %v55 = vld [vmem:[%s54] ss:$2 sm:$0x3f]
  %s56 = scalar_lea.vmem %s1, 192
  %v57 = vld [vmem:[%s56] sm:$0xff]
  %v58 = vld [vmem:[%s56 + $0x8] sm:$0xff]
  %v59 = vld [vmem:[%s56 + $0x10] sm:$0xff]
  %v60 = vld [vmem:[%s56 + $0x18] sm:$0xff]
  %v61 = vld [vmem:[%s56 + $0x20] sm:$0xff]
  %v62 = vld [vmem:[%s56 + $0x28] sm:$0xff]
  %v63 = vld [vmem:[%s56 + $0x30] sm:$0xff]
  %v64 = vld [vmem:[%s56 + $0x38] sm:$0xff]
  %v65 = vld [vmem:[%s56 + $0x40] sm:$0xff]
  %v66 = vld [vmem:[%s56 + $0x48] sm:$0xff]
  %v67 = vld [vmem:[%s56 + $0x50] sm:$0xff]
  %v68 = vld [vmem:[%s56 + $0x58] sm:$0xff]
  %v69 = vld [vmem:[%s56 + $0x60] sm:$0xff]
  %v70 = vld [vmem:[%s56 + $0x68] sm:$0xff]
  %v71 = vld [vmem:[%s56 + $0x70] sm:$0xff]
  %v72 = vld [vmem:[%s56 + $0x78] sm:$0xff]
  %v73 = vld [vmem:[%s56 + $0x80] sm:$0xff]
  %v74 = vld [vmem:[%s56 + $0x88] sm:$0xff]
  %v75 = vld [vmem:[%s56 + $0x90] sm:$0xff]
  %v76 = vld [vmem:[%s56 + $0x98] sm:$0xff]
  %v77 = vld [vmem:[%s56 + $0xa0] sm:$0xff]
  %v78 = vld [vmem:[%s56 + $0xa8] sm:$0xff]
  %v79 = vld [vmem:[%s56 + $0xb0] sm:$0xff]
  %v80 = vld [vmem:[%s56 + $0xb8] sm:$0xff]
  %s81 = scalar_lea.vmem %s0, 2
  %v82 = vld [vmem:[%s81] ss:$2 sm:$0xff]
  %s83 = scalar_lea.vmem %s0, 18
  %v84 = vld [vmem:[%s83] ss:$2 sm:$0xff]
  %s85 = scalar_lea.vmem %s0, 34
  %v86 = vld [vmem:[%s85] ss:$2 sm:$0xff]
  %s87 = scalar_lea.vmem %s0, 50
  %v88 = vld [vmem:[%s87] ss:$2 sm:$0x3f]
  %vm89 = vcmask 785408
  %v91 = vsel %vm89, %v49, 0
  %v94 = vsel %vm89, %v51, 0
  %v97 = vsel %vm89, %v53, 0
  %v100 = vsel %vm89, %v55, 0
  %102 = vmatpush.msra.mxu0 0.0
  %103 = vmatpush.msra.mxu0 0.0
  %104 = vmatpush.msra.mxu0 0.0
  %105 = vmatpush.msra.mxu0 0.0
  %106 = vmatpush.msra.mxu0 %v79
  %107 = vmatpush.msra.mxu0 %v77
  %108 = vmatpush.msra.mxu0 %v75
  %109 = vmatpush.msra.mxu0 %v73
  %110 = vmatpush.msra.mxu0 %v71
  %111 = vmatpush.msra.mxu0 %v69
  %112 = vmatpush.msra.mxu0 %v67
  %113 = vmatpush.msra.mxu0 %v65
  %114 = vmatpush.msra.mxu0 %v63
  %115 = vmatpush.msra.mxu0 %v61
  %116 = vmatpush.msra.mxu0 %v59
  %117 = vmatpush.msra.mxu0 %v57
  %118 = vmatmul.f32.gmra.mxu0 %v91
  %v119 = vpop.f32.mrf.mxu0
  %v120 = vadd.f32 0.0, %v119
  %121 = vmatmul.f32.gmra.mxu0 %v94
  %v122 = vpop.f32.mrf.mxu0
  %v123 = vadd.f32 0.0, %v122
  %124 = vmatmul.f32.gmra.mxu0 %v97
  %v125 = vpop.f32.mrf.mxu0
  %v126 = vadd.f32 0.0, %v125
  %127 = vmatmul.f32.gmra.mxu0 %v100
  %v128 = vpop.f32.mrf.mxu0
  %v129 = vadd.f32 0.0, %v128
  %130 = vdwg.mxu0
  %131 = vmatpush.msra.mxu0 0.0
  %132 = vmatpush.msra.mxu0 0.0
  %133 = vmatpush.msra.mxu0 0.0
  %134 = vmatpush.msra.mxu0 0.0
  %135 = vmatpush.msra.mxu0 %v80
  %136 = vmatpush.msra.mxu0 %v78
  %137 = vmatpush.msra.mxu0 %v76
  %138 = vmatpush.msra.mxu0 %v74
  %139 = vmatpush.msra.mxu0 %v72
  %140 = vmatpush.msra.mxu0 %v70
  %141 = vmatpush.msra.mxu0 %v68
  %142 = vmatpush.msra.mxu0 %v66
  %143 = vmatpush.msra.mxu0 %v64
  %144 = vmatpush.msra.mxu0 %v62
  %145 = vmatpush.msra.mxu0 %v60
  %146 = vmatpush.msra.mxu0 %v58
  %147 = vmatmul.f32.gmra.mxu0 %v91
  %v148 = vpop.f32.mrf.mxu0
  %v149 = vadd.f32 0.0, %v148
  %150 = vmatmul.f32.gmra.mxu0 %v94
  %v151 = vpop.f32.mrf.mxu0
  %v152 = vadd.f32 0.0, %v151
  %153 = vmatmul.f32.gmra.mxu0 %v97
  %v154 = vpop.f32.mrf.mxu0
  %v155 = vadd.f32 0.0, %v154
  %156 = vmatmul.f32.gmra.mxu0 %v100
  %v157 = vpop.f32.mrf.mxu0
  %v158 = vadd.f32 0.0, %v157
  %159 = vdwg.mxu0
  %v161 = vsel %vm89, %v41, 0
  %v164 = vsel %vm89, %v43, 0
  %v167 = vsel %vm89, %v45, 0
  %v170 = vsel %vm89, %v47, 0
  %172 = vmatpush.msra.mxu0 0.0
  %173 = vmatpush.msra.mxu0 0.0
  %174 = vmatpush.msra.mxu0 0.0
  %175 = vmatpush.msra.mxu0 0.0
  %176 = vmatpush.msra.mxu0 %v39
  %177 = vmatpush.msra.mxu0 %v37
  %178 = vmatpush.msra.mxu0 %v35
  %179 = vmatpush.msra.mxu0 %v33
  %180 = vmatpush.msra.mxu0 %v31
  %181 = vmatpush.msra.mxu0 %v29
  %182 = vmatpush.msra.mxu0 %v27
  %183 = vmatpush.msra.mxu0 %v25
  %184 = vmatpush.msra.mxu0 %v23
  %185 = vmatpush.msra.mxu0 %v21
  %186 = vmatpush.msra.mxu0 %v19
  %187 = vmatpush.msra.mxu0 %v17
  %188 = vmatmul.f32.gmra.mxu0 %v161
  %v189 = vpop.f32.mrf.mxu0
  %v190 = vadd.f32 %v120, %v189
  %191 = vmatmul.f32.gmra.mxu0 %v164
  %v192 = vpop.f32.mrf.mxu0
  %v193 = vadd.f32 %v123, %v192
  %194 = vmatmul.f32.gmra.mxu0 %v167
  %v195 = vpop.f32.mrf.mxu0
  %v196 = vadd.f32 %v126, %v195
  %197 = vmatmul.f32.gmra.mxu0 %v170
  %v198 = vpop.f32.mrf.mxu0
  %v199 = vadd.f32 %v129, %v198
  %200 = vdwg.mxu0
  %201 = vmatpush.msra.mxu0 0.0
  %202 = vmatpush.msra.mxu0 0.0
  %203 = vmatpush.msra.mxu0 0.0
  %204 = vmatpush.msra.mxu0 0.0
  %205 = vmatpush.msra.mxu0 %v40
  %206 = vmatpush.msra.mxu0 %v38
  %207 = vmatpush.msra.mxu0 %v36
  %208 = vmatpush.msra.mxu0 %v34
  %209 = vmatpush.msra.mxu0 %v32
  %210 = vmatpush.msra.mxu0 %v30
  %211 = vmatpush.msra.mxu0 %v28
  %212 = vmatpush.msra.mxu0 %v26
  %213 = vmatpush.msra.mxu0 %v24
  %214 = vmatpush.msra.mxu0 %v22
  %215 = vmatpush.msra.mxu0 %v20
  %216 = vmatpush.msra.mxu0 %v18
  %217 = vmatmul.f32.gmra.mxu0 %v161
  %v218 = vpop.f32.mrf.mxu0
  %v219 = vadd.f32 %v149, %v218
  %220 = vmatmul.f32.gmra.mxu0 %v164
  %v221 = vpop.f32.mrf.mxu0
  %v222 = vadd.f32 %v152, %v221
  %223 = vmatmul.f32.gmra.mxu0 %v167
  %v224 = vpop.f32.mrf.mxu0
  %v225 = vadd.f32 %v155, %v224
  %226 = vmatmul.f32.gmra.mxu0 %v170
  %v227 = vpop.f32.mrf.mxu0
  %v228 = vadd.f32 %v158, %v227
  %229 = vdwg.mxu0
  %v231 = vsel %vm89, %v82, 0
  %v234 = vsel %vm89, %v84, 0
  %v237 = vsel %vm89, %v86, 0
  %v240 = vsel %vm89, %v88, 0
  %242 = vmatpush.msra.mxu0 0.0
  %243 = vmatpush.msra.mxu0 0.0
  %244 = vmatpush.msra.mxu0 0.0
  %245 = vmatpush.msra.mxu0 0.0
  %246 = vmatpush.msra.mxu0 %v79
  %247 = vmatpush.msra.mxu0 %v77
  %248 = vmatpush.msra.mxu0 %v75
  %249 = vmatpush.msra.mxu0 %v73
  %250 = vmatpush.msra.mxu0 %v71
  %251 = vmatpush.msra.mxu0 %v69
  %252 = vmatpush.msra.mxu0 %v67
  %253 = vmatpush.msra.mxu0 %v65
  %254 = vmatpush.msra.mxu0 %v63
  %255 = vmatpush.msra.mxu0 %v61
  %256 = vmatpush.msra.mxu0 %v59
  %257 = vmatpush.msra.mxu0 %v57
  %258 = vmatmul.f32.gmra.mxu0 %v231
  %v259 = vpop.f32.mrf.mxu0
  %v260 = vadd.f32 0.0, %v259
  %261 = vmatmul.f32.gmra.mxu0 %v234
  %v262 = vpop.f32.mrf.mxu0
  %v263 = vadd.f32 0.0, %v262
  %264 = vmatmul.f32.gmra.mxu0 %v237
  %v265 = vpop.f32.mrf.mxu0
  %v266 = vadd.f32 0.0, %v265
  %267 = vmatmul.f32.gmra.mxu0 %v240
  %v268 = vpop.f32.mrf.mxu0
  %v269 = vadd.f32 0.0, %v268
  %270 = vdwg.mxu0
  %271 = vmatpush.msra.mxu0 0.0
  %272 = vmatpush.msra.mxu0 0.0
  %273 = vmatpush.msra.mxu0 0.0
  %274 = vmatpush.msra.mxu0 0.0
  %275 = vmatpush.msra.mxu0 %v80
  %276 = vmatpush.msra.mxu0 %v78
  %277 = vmatpush.msra.mxu0 %v76
  %278 = vmatpush.msra.mxu0 %v74
  %279 = vmatpush.msra.mxu0 %v72
  %280 = vmatpush.msra.mxu0 %v70
  %281 = vmatpush.msra.mxu0 %v68
  %282 = vmatpush.msra.mxu0 %v66
  %283 = vmatpush.msra.mxu0 %v64
  %284 = vmatpush.msra.mxu0 %v62
  %285 = vmatpush.msra.mxu0 %v60
  %286 = vmatpush.msra.mxu0 %v58
  %287 = vmatmul.f32.gmra.mxu0 %v231
  %v288 = vpop.f32.mrf.mxu0
  %v289 = vadd.f32 0.0, %v288
  %290 = vmatmul.f32.gmra.mxu0 %v234
  %v291 = vpop.f32.mrf.mxu0
  %v292 = vadd.f32 0.0, %v291
  %293 = vmatmul.f32.gmra.mxu0 %v237
  %v294 = vpop.f32.mrf.mxu0
  %v295 = vadd.f32 0.0, %v294
  %296 = vmatmul.f32.gmra.mxu0 %v240
  %v297 = vpop.f32.mrf.mxu0
  %v298 = vadd.f32 0.0, %v297
  %299 = vdwg.mxu0
  %300 = vmatpush.msra.mxu0 0.0
  %301 = vmatpush.msra.mxu0 0.0
  %302 = vmatpush.msra.mxu0 0.0
  %303 = vmatpush.msra.mxu0 0.0
  %304 = vmatpush.msra.mxu0 %v39
  %305 = vmatpush.msra.mxu0 %v37
  %306 = vmatpush.msra.mxu0 %v35
  %307 = vmatpush.msra.mxu0 %v33
  %308 = vmatpush.msra.mxu0 %v31
  %309 = vmatpush.msra.mxu0 %v29
  %310 = vmatpush.msra.mxu0 %v27
  %311 = vmatpush.msra.mxu0 %v25
  %312 = vmatpush.msra.mxu0 %v23
  %313 = vmatpush.msra.mxu0 %v21
  %314 = vmatpush.msra.mxu0 %v19
  %315 = vmatpush.msra.mxu0 %v17
  %316 = vmatmul.f32.gmra.mxu0 %v91
  %v317 = vpop.f32.mrf.mxu0
  %v318 = vadd.f32 %v260, %v317
  %319 = vmatmul.f32.gmra.mxu0 %v94
  %v320 = vpop.f32.mrf.mxu0
  %v321 = vadd.f32 %v263, %v320
  %322 = vmatmul.f32.gmra.mxu0 %v97
  %v323 = vpop.f32.mrf.mxu0
  %v324 = vadd.f32 %v266, %v323
  %325 = vmatmul.f32.gmra.mxu0 %v100
  %v326 = vpop.f32.mrf.mxu0
  %v327 = vadd.f32 %v269, %v326
  %328 = vdwg.mxu0
  %329 = vmatpush.msra.mxu0 0.0
  %330 = vmatpush.msra.mxu0 0.0
  %331 = vmatpush.msra.mxu0 0.0
  %332 = vmatpush.msra.mxu0 0.0
  %333 = vmatpush.msra.mxu0 %v40
  %334 = vmatpush.msra.mxu0 %v38
  %335 = vmatpush.msra.mxu0 %v36
  %336 = vmatpush.msra.mxu0 %v34
  %337 = vmatpush.msra.mxu0 %v32
  %338 = vmatpush.msra.mxu0 %v30
  %339 = vmatpush.msra.mxu0 %v28
  %340 = vmatpush.msra.mxu0 %v26
  %341 = vmatpush.msra.mxu0 %v24
  %342 = vmatpush.msra.mxu0 %v22
  %343 = vmatpush.msra.mxu0 %v20
  %344 = vmatpush.msra.mxu0 %v18
  %345 = vmatmul.f32.gmra.mxu0 %v91
  %v346 = vpop.f32.mrf.mxu0
  %v347 = vadd.f32 %v289, %v346
  %348 = vmatmul.f32.gmra.mxu0 %v94
  %v349 = vpop.f32.mrf.mxu0
  %v350 = vadd.f32 %v292, %v349
  %351 = vmatmul.f32.gmra.mxu0 %v97
  %v352 = vpop.f32.mrf.mxu0
  %v353 = vadd.f32 %v295, %v352
  %354 = vmatmul.f32.gmra.mxu0 %v100
  %v355 = vpop.f32.mrf.mxu0
  %v356 = vadd.f32 %v298, %v355
  %357 = vdwg.mxu0
  %s358 = scalar_lea.vmem %s1, 384
  %v359 = vld [vmem:[%s358] sm:$0xff]
  %v360 = vld [vmem:[%s358 + $0x8] sm:$0xff]
  %v361 = vld [vmem:[%s358 + $0x10] sm:$0xff]
  %v362 = vld [vmem:[%s358 + $0x18] sm:$0xff]
  %v363 = vld [vmem:[%s358 + $0x20] sm:$0xff]
  %v364 = vld [vmem:[%s358 + $0x28] sm:$0xff]
  %v365 = vld [vmem:[%s358 + $0x30] sm:$0xff]
  %v366 = vld [vmem:[%s358 + $0x38] sm:$0xff]
  %v367 = vld [vmem:[%s358 + $0x40] sm:$0xff]
  %v368 = vld [vmem:[%s358 + $0x48] sm:$0xff]
  %v369 = vld [vmem:[%s358 + $0x50] sm:$0xff]
  %v370 = vld [vmem:[%s358 + $0x58] sm:$0xff]
  %v371 = vld [vmem:[%s358 + $0x60] sm:$0xff]
  %v372 = vld [vmem:[%s358 + $0x68] sm:$0xff]
  %v373 = vld [vmem:[%s358 + $0x70] sm:$0xff]
  %v374 = vld [vmem:[%s358 + $0x78] sm:$0xff]
  %v375 = vld [vmem:[%s358 + $0x80] sm:$0xff]
  %v376 = vld [vmem:[%s358 + $0x88] sm:$0xff]
  %v377 = vld [vmem:[%s358 + $0x90] sm:$0xff]
  %v378 = vld [vmem:[%s358 + $0x98] sm:$0xff]
  %v379 = vld [vmem:[%s358 + $0xa0] sm:$0xff]
  %v380 = vld [vmem:[%s358 + $0xa8] sm:$0xff]
  %v381 = vld [vmem:[%s358 + $0xb0] sm:$0xff]
  %v382 = vld [vmem:[%s358 + $0xb8] sm:$0xff]
  %s383 = scalar_lea.vmem %s0, 3
  %v384 = vld [vmem:[%s383] ss:$2 sm:$0xff]
  %s385 = scalar_lea.vmem %s0, 19
  %v386 = vld [vmem:[%s385] ss:$2 sm:$0xff]
  %s387 = scalar_lea.vmem %s0, 35
  %v388 = vld [vmem:[%s387] ss:$2 sm:$0xff]
  %s389 = scalar_lea.vmem %s0, 51
  %v390 = vld [vmem:[%s389] ss:$2 sm:$0x3f]
  %391 = vmatpush.msra.mxu0 0.0
  %392 = vmatpush.msra.mxu0 0.0
  %393 = vmatpush.msra.mxu0 0.0
  %394 = vmatpush.msra.mxu0 0.0
  %395 = vmatpush.msra.mxu0 %v381
  %396 = vmatpush.msra.mxu0 %v379
  %397 = vmatpush.msra.mxu0 %v377
  %398 = vmatpush.msra.mxu0 %v375
  %399 = vmatpush.msra.mxu0 %v373
  %400 = vmatpush.msra.mxu0 %v371
  %401 = vmatpush.msra.mxu0 %v369
  %402 = vmatpush.msra.mxu0 %v367
  %403 = vmatpush.msra.mxu0 %v365
  %404 = vmatpush.msra.mxu0 %v363
  %405 = vmatpush.msra.mxu0 %v361
  %406 = vmatpush.msra.mxu0 %v359
  %407 = vmatmul.f32.gmra.mxu0 %v231
  %v408 = vpop.f32.mrf.mxu0
  %v409 = vadd.f32 0.0, %v408
  %410 = vmatmul.f32.gmra.mxu0 %v234
  %v411 = vpop.f32.mrf.mxu0
  %v412 = vadd.f32 0.0, %v411
  %413 = vmatmul.f32.gmra.mxu0 %v237
  %v414 = vpop.f32.mrf.mxu0
  %v415 = vadd.f32 0.0, %v414
  %416 = vmatmul.f32.gmra.mxu0 %v240
  %v417 = vpop.f32.mrf.mxu0
  %v418 = vadd.f32 0.0, %v417
  %419 = vdwg.mxu0
  %420 = vmatpush.msra.mxu0 0.0
  %421 = vmatpush.msra.mxu0 0.0
  %422 = vmatpush.msra.mxu0 0.0
  %423 = vmatpush.msra.mxu0 0.0
  %424 = vmatpush.msra.mxu0 %v382
  %425 = vmatpush.msra.mxu0 %v380
  %426 = vmatpush.msra.mxu0 %v378
  %427 = vmatpush.msra.mxu0 %v376
  %428 = vmatpush.msra.mxu0 %v374
  %429 = vmatpush.msra.mxu0 %v372
  %430 = vmatpush.msra.mxu0 %v370
  %431 = vmatpush.msra.mxu0 %v368
  %432 = vmatpush.msra.mxu0 %v366
  %433 = vmatpush.msra.mxu0 %v364
  %434 = vmatpush.msra.mxu0 %v362
  %435 = vmatpush.msra.mxu0 %v360
  %436 = vmatmul.f32.gmra.mxu0 %v231
  %v437 = vpop.f32.mrf.mxu0
  %v438 = vadd.f32 0.0, %v437
  %439 = vmatmul.f32.gmra.mxu0 %v234
  %v440 = vpop.f32.mrf.mxu0
  %v441 = vadd.f32 0.0, %v440
  %442 = vmatmul.f32.gmra.mxu0 %v237
  %v443 = vpop.f32.mrf.mxu0
  %v444 = vadd.f32 0.0, %v443
  %445 = vmatmul.f32.gmra.mxu0 %v240
  %v446 = vpop.f32.mrf.mxu0
  %v447 = vadd.f32 0.0, %v446
  %448 = vdwg.mxu0
  %v449 = vadd.f32 %v190, %v409
  %v450 = vadd.f32 %v219, %v438
  %v451 = vadd.f32 %v193, %v412
  %v452 = vadd.f32 %v222, %v441
  %v453 = vadd.f32 %v196, %v415
  %v454 = vadd.f32 %v225, %v444
  %v455 = vadd.f32 %v199, %v418
  %v456 = vadd.f32 %v228, %v447
  %v458 = vsel %vm89, %v384, 0
  %v461 = vsel %vm89, %v386, 0
  %v464 = vsel %vm89, %v388, 0
  %v467 = vsel %vm89, %v390, 0
  %469 = vmatpush.msra.mxu0 0.0
  %470 = vmatpush.msra.mxu0 0.0
  %471 = vmatpush.msra.mxu0 0.0
  %472 = vmatpush.msra.mxu0 0.0
  %473 = vmatpush.msra.mxu0 %v381
  %474 = vmatpush.msra.mxu0 %v379
  %475 = vmatpush.msra.mxu0 %v377
  %476 = vmatpush.msra.mxu0 %v375
  %477 = vmatpush.msra.mxu0 %v373
  %478 = vmatpush.msra.mxu0 %v371
  %479 = vmatpush.msra.mxu0 %v369
  %480 = vmatpush.msra.mxu0 %v367
  %481 = vmatpush.msra.mxu0 %v365
  %482 = vmatpush.msra.mxu0 %v363
  %483 = vmatpush.msra.mxu0 %v361
  %484 = vmatpush.msra.mxu0 %v359
  %485 = vmatmul.f32.gmra.mxu0 %v458
  %v486 = vpop.f32.mrf.mxu0
  %v487 = vadd.f32 0.0, %v486
  %488 = vmatmul.f32.gmra.mxu0 %v461
  %v489 = vpop.f32.mrf.mxu0
  %v490 = vadd.f32 0.0, %v489
  %491 = vmatmul.f32.gmra.mxu0 %v464
  %v492 = vpop.f32.mrf.mxu0
  %v493 = vadd.f32 0.0, %v492
  %494 = vmatmul.f32.gmra.mxu0 %v467
  %v495 = vpop.f32.mrf.mxu0
  %v496 = vadd.f32 0.0, %v495
  %497 = vdwg.mxu0
  %498 = vmatpush.msra.mxu0 0.0
  %499 = vmatpush.msra.mxu0 0.0
  %500 = vmatpush.msra.mxu0 0.0
  %501 = vmatpush.msra.mxu0 0.0
  %502 = vmatpush.msra.mxu0 %v382
  %503 = vmatpush.msra.mxu0 %v380
  %504 = vmatpush.msra.mxu0 %v378
  %505 = vmatpush.msra.mxu0 %v376
  %506 = vmatpush.msra.mxu0 %v374
  %507 = vmatpush.msra.mxu0 %v372
  %508 = vmatpush.msra.mxu0 %v370
  %509 = vmatpush.msra.mxu0 %v368
  %510 = vmatpush.msra.mxu0 %v366
  %511 = vmatpush.msra.mxu0 %v364
  %512 = vmatpush.msra.mxu0 %v362
  %513 = vmatpush.msra.mxu0 %v360
  %514 = vmatmul.f32.gmra.mxu0 %v458
  %v515 = vpop.f32.mrf.mxu0
  %v516 = vadd.f32 0.0, %v515
  %517 = vmatmul.f32.gmra.mxu0 %v461
  %v518 = vpop.f32.mrf.mxu0
  %v519 = vadd.f32 0.0, %v518
  %520 = vmatmul.f32.gmra.mxu0 %v464
  %v521 = vpop.f32.mrf.mxu0
  %v522 = vadd.f32 0.0, %v521
  %523 = vmatmul.f32.gmra.mxu0 %v467
  %v524 = vpop.f32.mrf.mxu0
  %v525 = vadd.f32 0.0, %v524
  %526 = vdwg.mxu0
  %v527 = vadd.f32 %v318, %v487
  %v528 = vadd.f32 %v347, %v516
  %v529 = vadd.f32 %v321, %v490
  %v530 = vadd.f32 %v350, %v519
  %v531 = vadd.f32 %v324, %v493
  %v532 = vadd.f32 %v353, %v522
  %v533 = vadd.f32 %v327, %v496
  %v534 = vadd.f32 %v356, %v525
  %s535 = scalar_lea.vmem %s1, 576
  %v536 = vld [vmem:[%s535] sm:$0xff]
  %v537 = vld [vmem:[%s535 + $0x8] sm:$0xff]
  %v538 = vld [vmem:[%s535 + $0x10] sm:$0xff]
  %v539 = vld [vmem:[%s535 + $0x18] sm:$0xff]
  %v540 = vld [vmem:[%s535 + $0x20] sm:$0xff]
  %v541 = vld [vmem:[%s535 + $0x28] sm:$0xff]
  %v542 = vld [vmem:[%s535 + $0x30] sm:$0xff]
  %v543 = vld [vmem:[%s535 + $0x38] sm:$0xff]
  %v544 = vld [vmem:[%s535 + $0x40] sm:$0xff]
  %v545 = vld [vmem:[%s535 + $0x48] sm:$0xff]
  %v546 = vld [vmem:[%s535 + $0x50] sm:$0xff]
  %v547 = vld [vmem:[%s535 + $0x58] sm:$0xff]
  %v548 = vld [vmem:[%s535 + $0x60] sm:$0xff]
  %v549 = vld [vmem:[%s535 + $0x68] sm:$0xff]
  %v550 = vld [vmem:[%s535 + $0x70] sm:$0xff]
  %v551 = vld [vmem:[%s535 + $0x78] sm:$0xff]
  %v552 = vld [vmem:[%s535 + $0x80] sm:$0xff]
  %v553 = vld [vmem:[%s535 + $0x88] sm:$0xff]
  %v554 = vld [vmem:[%s535 + $0x90] sm:$0xff]
  %v555 = vld [vmem:[%s535 + $0x98] sm:$0xff]
  %v556 = vld [vmem:[%s535 + $0xa0] sm:$0xff]
  %v557 = vld [vmem:[%s535 + $0xa8] sm:$0xff]
  %v558 = vld [vmem:[%s535 + $0xb0] sm:$0xff]
  %v559 = vld [vmem:[%s535 + $0xb8] sm:$0xff]
  %s560 = scalar_lea.vmem %s0, 4
  %v561 = vld [vmem:[%s560] ss:$2 sm:$0xff]
  %s562 = scalar_lea.vmem %s0, 20
  %v563 = vld [vmem:[%s562] ss:$2 sm:$0xff]
  %s564 = scalar_lea.vmem %s0, 36
  %v565 = vld [vmem:[%s564] ss:$2 sm:$0xff]
  %s566 = scalar_lea.vmem %s0, 52
  %v567 = vld [vmem:[%s566] ss:$2 sm:$0x3f]
  %568 = vmatpush.msra.mxu0 0.0
  %569 = vmatpush.msra.mxu0 0.0
  %570 = vmatpush.msra.mxu0 0.0
  %571 = vmatpush.msra.mxu0 0.0
  %572 = vmatpush.msra.mxu0 %v558
  %573 = vmatpush.msra.mxu0 %v556
  %574 = vmatpush.msra.mxu0 %v554
  %575 = vmatpush.msra.mxu0 %v552
  %576 = vmatpush.msra.mxu0 %v550
  %577 = vmatpush.msra.mxu0 %v548
  %578 = vmatpush.msra.mxu0 %v546
  %579 = vmatpush.msra.mxu0 %v544
  %580 = vmatpush.msra.mxu0 %v542
  %581 = vmatpush.msra.mxu0 %v540
  %582 = vmatpush.msra.mxu0 %v538
  %583 = vmatpush.msra.mxu0 %v536
  %584 = vmatmul.f32.gmra.mxu0 %v458
  %v585 = vpop.f32.mrf.mxu0
  %v586 = vadd.f32 0.0, %v585
  %587 = vmatmul.f32.gmra.mxu0 %v461
  %v588 = vpop.f32.mrf.mxu0
  %v589 = vadd.f32 0.0, %v588
  %590 = vmatmul.f32.gmra.mxu0 %v464
  %v591 = vpop.f32.mrf.mxu0
  %v592 = vadd.f32 0.0, %v591
  %593 = vmatmul.f32.gmra.mxu0 %v467
  %v594 = vpop.f32.mrf.mxu0
  %v595 = vadd.f32 0.0, %v594
  %596 = vdwg.mxu0
  %597 = vmatpush.msra.mxu0 0.0
  %598 = vmatpush.msra.mxu0 0.0
  %599 = vmatpush.msra.mxu0 0.0
  %600 = vmatpush.msra.mxu0 0.0
  %601 = vmatpush.msra.mxu0 %v559
  %602 = vmatpush.msra.mxu0 %v557
  %603 = vmatpush.msra.mxu0 %v555
  %604 = vmatpush.msra.mxu0 %v553
  %605 = vmatpush.msra.mxu0 %v551
  %606 = vmatpush.msra.mxu0 %v549
  %607 = vmatpush.msra.mxu0 %v547
  %608 = vmatpush.msra.mxu0 %v545
  %609 = vmatpush.msra.mxu0 %v543
  %610 = vmatpush.msra.mxu0 %v541
  %611 = vmatpush.msra.mxu0 %v539
  %612 = vmatpush.msra.mxu0 %v537
  %613 = vmatmul.f32.gmra.mxu0 %v458
  %v614 = vpop.f32.mrf.mxu0
  %v615 = vadd.f32 0.0, %v614
  %616 = vmatmul.f32.gmra.mxu0 %v461
  %v617 = vpop.f32.mrf.mxu0
  %v618 = vadd.f32 0.0, %v617
  %619 = vmatmul.f32.gmra.mxu0 %v464
  %v620 = vpop.f32.mrf.mxu0
  %v621 = vadd.f32 0.0, %v620
  %622 = vmatmul.f32.gmra.mxu0 %v467
  %v623 = vpop.f32.mrf.mxu0
  %v624 = vadd.f32 0.0, %v623
  %625 = vdwg.mxu0
  %v626 = vadd.f32 %v449, %v586
  %v627 = vadd.f32 %v450, %v615
  %v628 = vadd.f32 %v451, %v589
  %v629 = vadd.f32 %v452, %v618
  %v630 = vadd.f32 %v453, %v592
  %v631 = vadd.f32 %v454, %v621
  %v632 = vadd.f32 %v455, %v595
  %v633 = vadd.f32 %v456, %v624
  %v635 = vsel %vm89, %v561, 0
  %v638 = vsel %vm89, %v563, 0
  %v641 = vsel %vm89, %v565, 0
  %v644 = vsel %vm89, %v567, 0
  %646 = vmatpush.msra.mxu0 0.0
  %647 = vmatpush.msra.mxu0 0.0
  %648 = vmatpush.msra.mxu0 0.0
  %649 = vmatpush.msra.mxu0 0.0
  %650 = vmatpush.msra.mxu0 %v558
  %651 = vmatpush.msra.mxu0 %v556
  %652 = vmatpush.msra.mxu0 %v554
  %653 = vmatpush.msra.mxu0 %v552
  %654 = vmatpush.msra.mxu0 %v550
  %655 = vmatpush.msra.mxu0 %v548
  %656 = vmatpush.msra.mxu0 %v546
  %657 = vmatpush.msra.mxu0 %v544
  %658 = vmatpush.msra.mxu0 %v542
  %659 = vmatpush.msra.mxu0 %v540
  %660 = vmatpush.msra.mxu0 %v538
  %661 = vmatpush.msra.mxu0 %v536
  %662 = vmatmul.f32.gmra.mxu0 %v635
  %v663 = vpop.f32.mrf.mxu0
  %v664 = vadd.f32 0.0, %v663
  %665 = vmatmul.f32.gmra.mxu0 %v638
  %v666 = vpop.f32.mrf.mxu0
  %v667 = vadd.f32 0.0, %v666
  %668 = vmatmul.f32.gmra.mxu0 %v641
  %v669 = vpop.f32.mrf.mxu0
  %v670 = vadd.f32 0.0, %v669
  %671 = vmatmul.f32.gmra.mxu0 %v644
  %v672 = vpop.f32.mrf.mxu0
  %v673 = vadd.f32 0.0, %v672
  %674 = vdwg.mxu0
  %675 = vmatpush.msra.mxu0 0.0
  %676 = vmatpush.msra.mxu0 0.0
  %677 = vmatpush.msra.mxu0 0.0
  %678 = vmatpush.msra.mxu0 0.0
  %679 = vmatpush.msra.mxu0 %v559
  %680 = vmatpush.msra.mxu0 %v557
  %681 = vmatpush.msra.mxu0 %v555
  %682 = vmatpush.msra.mxu0 %v553
  %683 = vmatpush.msra.mxu0 %v551
  %684 = vmatpush.msra.mxu0 %v549
  %685 = vmatpush.msra.mxu0 %v547
  %686 = vmatpush.msra.mxu0 %v545
  %687 = vmatpush.msra.mxu0 %v543
  %688 = vmatpush.msra.mxu0 %v541
  %689 = vmatpush.msra.mxu0 %v539
  %690 = vmatpush.msra.mxu0 %v537
  %691 = vmatmul.f32.gmra.mxu0 %v635
  %v692 = vpop.f32.mrf.mxu0
  %v693 = vadd.f32 0.0, %v692
  %694 = vmatmul.f32.gmra.mxu0 %v638
  %v695 = vpop.f32.mrf.mxu0
  %v696 = vadd.f32 0.0, %v695
  %697 = vmatmul.f32.gmra.mxu0 %v641
  %v698 = vpop.f32.mrf.mxu0
  %v699 = vadd.f32 0.0, %v698
  %700 = vmatmul.f32.gmra.mxu0 %v644
  %v701 = vpop.f32.mrf.mxu0
  %v702 = vadd.f32 0.0, %v701
  %703 = vdwg.mxu0
  %v704 = vadd.f32 %v527, %v664
  %v705 = vadd.f32 %v528, %v693
  %v706 = vadd.f32 %v529, %v667
  %v707 = vadd.f32 %v530, %v696
  %v708 = vadd.f32 %v531, %v670
  %v709 = vadd.f32 %v532, %v699
  %v710 = vadd.f32 %v533, %v673
  %v711 = vadd.f32 %v534, %v702
  %s712 = scalar_lea.vmem %s1, 768
  %v713 = vld [vmem:[%s712] sm:$0xff]
  %v714 = vld [vmem:[%s712 + $0x8] sm:$0xff]
  %v715 = vld [vmem:[%s712 + $0x10] sm:$0xff]
  %v716 = vld [vmem:[%s712 + $0x18] sm:$0xff]
  %v717 = vld [vmem:[%s712 + $0x20] sm:$0xff]
  %v718 = vld [vmem:[%s712 + $0x28] sm:$0xff]
  %v719 = vld [vmem:[%s712 + $0x30] sm:$0xff]
  %v720 = vld [vmem:[%s712 + $0x38] sm:$0xff]
  %v721 = vld [vmem:[%s712 + $0x40] sm:$0xff]
  %v722 = vld [vmem:[%s712 + $0x48] sm:$0xff]
  %v723 = vld [vmem:[%s712 + $0x50] sm:$0xff]
  %v724 = vld [vmem:[%s712 + $0x58] sm:$0xff]
  %v725 = vld [vmem:[%s712 + $0x60] sm:$0xff]
  %v726 = vld [vmem:[%s712 + $0x68] sm:$0xff]
  %v727 = vld [vmem:[%s712 + $0x70] sm:$0xff]
  %v728 = vld [vmem:[%s712 + $0x78] sm:$0xff]
  %v729 = vld [vmem:[%s712 + $0x80] sm:$0xff]
  %v730 = vld [vmem:[%s712 + $0x88] sm:$0xff]
  %v731 = vld [vmem:[%s712 + $0x90] sm:$0xff]
  %v732 = vld [vmem:[%s712 + $0x98] sm:$0xff]
  %v733 = vld [vmem:[%s712 + $0xa0] sm:$0xff]
  %v734 = vld [vmem:[%s712 + $0xa8] sm:$0xff]
  %v735 = vld [vmem:[%s712 + $0xb0] sm:$0xff]
  %v736 = vld [vmem:[%s712 + $0xb8] sm:$0xff]
  %s737 = scalar_lea.vmem %s0, 5
  %v738 = vld [vmem:[%s737] ss:$2 sm:$0xff]
  %s739 = scalar_lea.vmem %s0, 21
  %v740 = vld [vmem:[%s739] ss:$2 sm:$0xff]
  %s741 = scalar_lea.vmem %s0, 37
  %v742 = vld [vmem:[%s741] ss:$2 sm:$0xff]
  %s743 = scalar_lea.vmem %s0, 53
  %v744 = vld [vmem:[%s743] ss:$2 sm:$0x3f]
  %745 = vmatpush.msra.mxu0 0.0
  %746 = vmatpush.msra.mxu0 0.0
  %747 = vmatpush.msra.mxu0 0.0
  %748 = vmatpush.msra.mxu0 0.0
  %749 = vmatpush.msra.mxu0 %v735
  %750 = vmatpush.msra.mxu0 %v733
  %751 = vmatpush.msra.mxu0 %v731
  %752 = vmatpush.msra.mxu0 %v729
  %753 = vmatpush.msra.mxu0 %v727
  %754 = vmatpush.msra.mxu0 %v725
  %755 = vmatpush.msra.mxu0 %v723
  %756 = vmatpush.msra.mxu0 %v721
  %757 = vmatpush.msra.mxu0 %v719
  %758 = vmatpush.msra.mxu0 %v717
  %759 = vmatpush.msra.mxu0 %v715
  %760 = vmatpush.msra.mxu0 %v713
  %761 = vmatmul.f32.gmra.mxu0 %v635
  %v762 = vpop.f32.mrf.mxu0
  %v763 = vadd.f32 0.0, %v762
  %764 = vmatmul.f32.gmra.mxu0 %v638
  %v765 = vpop.f32.mrf.mxu0
  %v766 = vadd.f32 0.0, %v765
  %767 = vmatmul.f32.gmra.mxu0 %v641
  %v768 = vpop.f32.mrf.mxu0
  %v769 = vadd.f32 0.0, %v768
  %770 = vmatmul.f32.gmra.mxu0 %v644
  %v771 = vpop.f32.mrf.mxu0
  %v772 = vadd.f32 0.0, %v771
  %773 = vdwg.mxu0
  %774 = vmatpush.msra.mxu0 0.0
  %775 = vmatpush.msra.mxu0 0.0
  %776 = vmatpush.msra.mxu0 0.0
  %777 = vmatpush.msra.mxu0 0.0
  %778 = vmatpush.msra.mxu0 %v736
  %779 = vmatpush.msra.mxu0 %v734
  %780 = vmatpush.msra.mxu0 %v732
  %781 = vmatpush.msra.mxu0 %v730
  %782 = vmatpush.msra.mxu0 %v728
  %783 = vmatpush.msra.mxu0 %v726
  %784 = vmatpush.msra.mxu0 %v724
  %785 = vmatpush.msra.mxu0 %v722
  %786 = vmatpush.msra.mxu0 %v720
  %787 = vmatpush.msra.mxu0 %v718
  %788 = vmatpush.msra.mxu0 %v716
  %789 = vmatpush.msra.mxu0 %v714
  %790 = vmatmul.f32.gmra.mxu0 %v635
  %v791 = vpop.f32.mrf.mxu0
  %v792 = vadd.f32 0.0, %v791
  %793 = vmatmul.f32.gmra.mxu0 %v638
  %v794 = vpop.f32.mrf.mxu0
  %v795 = vadd.f32 0.0, %v794
  %796 = vmatmul.f32.gmra.mxu0 %v641
  %v797 = vpop.f32.mrf.mxu0
  %v798 = vadd.f32 0.0, %v797
  %799 = vmatmul.f32.gmra.mxu0 %v644
  %v800 = vpop.f32.mrf.mxu0
  %v801 = vadd.f32 0.0, %v800
  %802 = vdwg.mxu0
  %v803 = vadd.f32 %v626, %v763
  %v804 = vadd.f32 %v627, %v792
  %v805 = vadd.f32 %v628, %v766
  %v806 = vadd.f32 %v629, %v795
  %v807 = vadd.f32 %v630, %v769
  %v808 = vadd.f32 %v631, %v798
  %v809 = vadd.f32 %v632, %v772
  %v810 = vadd.f32 %v633, %v801
  %v812 = vsel %vm89, %v738, 0
  %v815 = vsel %vm89, %v740, 0
  %v818 = vsel %vm89, %v742, 0
  %v821 = vsel %vm89, %v744, 0
  %823 = vmatpush.msra.mxu0 0.0
  %824 = vmatpush.msra.mxu0 0.0
  %825 = vmatpush.msra.mxu0 0.0
  %826 = vmatpush.msra.mxu0 0.0
  %827 = vmatpush.msra.mxu0 %v735
  %828 = vmatpush.msra.mxu0 %v733
  %829 = vmatpush.msra.mxu0 %v731
  %830 = vmatpush.msra.mxu0 %v729
  %831 = vmatpush.msra.mxu0 %v727
  %832 = vmatpush.msra.mxu0 %v725
  %833 = vmatpush.msra.mxu0 %v723
  %834 = vmatpush.msra.mxu0 %v721
  %835 = vmatpush.msra.mxu0 %v719
  %836 = vmatpush.msra.mxu0 %v717
  %837 = vmatpush.msra.mxu0 %v715
  %838 = vmatpush.msra.mxu0 %v713
  %839 = vmatmul.f32.gmra.mxu0 %v812
  %v840 = vpop.f32.mrf.mxu0
  %v841 = vadd.f32 0.0, %v840
  %842 = vmatmul.f32.gmra.mxu0 %v815
  %v843 = vpop.f32.mrf.mxu0
  %v844 = vadd.f32 0.0, %v843
  %845 = vmatmul.f32.gmra.mxu0 %v818
  %v846 = vpop.f32.mrf.mxu0
  %v847 = vadd.f32 0.0, %v846
  %848 = vmatmul.f32.gmra.mxu0 %v821
  %v849 = vpop.f32.mrf.mxu0
  %v850 = vadd.f32 0.0, %v849
  %851 = vdwg.mxu0
  %852 = vmatpush.msra.mxu0 0.0
  %853 = vmatpush.msra.mxu0 0.0
  %854 = vmatpush.msra.mxu0 0.0
  %855 = vmatpush.msra.mxu0 0.0
  %856 = vmatpush.msra.mxu0 %v736
  %857 = vmatpush.msra.mxu0 %v734
  %858 = vmatpush.msra.mxu0 %v732
  %859 = vmatpush.msra.mxu0 %v730
  %860 = vmatpush.msra.mxu0 %v728
  %861 = vmatpush.msra.mxu0 %v726
  %862 = vmatpush.msra.mxu0 %v724
  %863 = vmatpush.msra.mxu0 %v722
  %864 = vmatpush.msra.mxu0 %v720
  %865 = vmatpush.msra.mxu0 %v718
  %866 = vmatpush.msra.mxu0 %v716
  %867 = vmatpush.msra.mxu0 %v714
  %868 = vmatmul.f32.gmra.mxu0 %v812
  %v869 = vpop.f32.mrf.mxu0
  %v870 = vadd.f32 0.0, %v869
  %871 = vmatmul.f32.gmra.mxu0 %v815
  %v872 = vpop.f32.mrf.mxu0
  %v873 = vadd.f32 0.0, %v872
  %874 = vmatmul.f32.gmra.mxu0 %v818
  %v875 = vpop.f32.mrf.mxu0
  %v876 = vadd.f32 0.0, %v875
  %877 = vmatmul.f32.gmra.mxu0 %v821
  %v878 = vpop.f32.mrf.mxu0
  %v879 = vadd.f32 0.0, %v878
  %880 = vdwg.mxu0
  %v881 = vadd.f32 %v704, %v841
  %v882 = vadd.f32 %v705, %v870
  %v883 = vadd.f32 %v706, %v844
  %v884 = vadd.f32 %v707, %v873
  %v885 = vadd.f32 %v708, %v847
  %v886 = vadd.f32 %v709, %v876
  %v887 = vadd.f32 %v710, %v850
  %v888 = vadd.f32 %v711, %v879
  %v889 = vld [vmem:[%s2] sm:$0x3]
  %v891 = vperm.slane %v889, 0
  %v892 = vperm.slane %v889, 1
  %v895 = vadd.f32 %v803, %v891
  %v896 = vadd.f32 %v804, %v892
  %v897 = vadd.f32 %v805, %v891
  %v898 = vadd.f32 %v806, %v892
  %v899 = vadd.f32 %v807, %v891
  %v900 = vadd.f32 %v808, %v892
  %v901 = vadd.f32 %v809, %v891
  %v902 = vadd.f32 %v810, %v892
  %v903 = vtanh.pop %v895
  %v904 = vtanh.pop %v896
  %v905 = vtanh.pop %v897
  %v906 = vtanh.pop %v898
  %v907 = vtanh.pop %v899
  %v908 = vtanh.pop %v900
  %v909 = vtanh.pop %v901
  %v910 = vtanh.pop %v902
  %v911 = vadd.f32 %v881, %v891
  %v912 = vadd.f32 %v882, %v892
  %v913 = vadd.f32 %v883, %v891
  %v914 = vadd.f32 %v884, %v892
  %v915 = vadd.f32 %v885, %v891
  %v916 = vadd.f32 %v886, %v892
  %v917 = vadd.f32 %v887, %v891
  %v918 = vadd.f32 %v888, %v892
  %v919 = vtanh.pop %v911
  %v920 = vtanh.pop %v912
  %v921 = vtanh.pop %v913
  %v922 = vtanh.pop %v914
  %v923 = vtanh.pop %v915
  %v924 = vtanh.pop %v916
  %v925 = vtanh.pop %v917
  %v926 = vtanh.pop %v918
  %v927 = vadd.f32 %v903, %v919
  %v928 = vadd.f32 %v904, %v920
  %v929 = vadd.f32 %v905, %v921
  %v930 = vadd.f32 %v906, %v922
  %v931 = vadd.f32 %v907, %v923
  %v932 = vadd.f32 %v908, %v924
  %v933 = vadd.f32 %v909, %v925
  %v934 = vadd.f32 %v910, %v926
  %v935 = vmul.f32 %v927, 0.5
  %v936 = vmul.f32 %v928, 0.5
  %v937 = vmul.f32 %v929, 0.5
  %v938 = vmul.f32 %v930, 0.5
  %v939 = vmul.f32 %v931, 0.5
  %v940 = vmul.f32 %v932, 0.5
  %v941 = vmul.f32 %v933, 0.5
  %v942 = vmul.f32 %v934, 0.5
  %v943 = vld [vmem:[%s3] sm:$0xff]
  %v944 = vld [vmem:[%s3 + $0x8] sm:$0xff]
  %v945 = vld [vmem:[%s3 + $0x10] sm:$0xff]
  %v946 = vld [vmem:[%s3 + $0x18] sm:$0xff]
  %v947 = vld [vmem:[%s3 + $0x20] sm:$0xff]
  %v948 = vld [vmem:[%s3 + $0x28] sm:$0xff]
  %v949 = vld [vmem:[%s3 + $0x30] sm:$0xff]
  %v950 = vld [vmem:[%s3 + $0x38] sm:$0xff]
  %v951 = vld [vmem:[%s3 + $0x40] sm:$0xff]
  %v952 = vld [vmem:[%s3 + $0x48] sm:$0xff]
  %v953 = vld [vmem:[%s3 + $0x50] sm:$0xff]
  %v954 = vld [vmem:[%s3 + $0x58] sm:$0xff]
  %v955 = vld [vmem:[%s3 + $0x60] sm:$0xff]
  %v956 = vld [vmem:[%s3 + $0x68] sm:$0xff]
  %v957 = vld [vmem:[%s3 + $0x70] sm:$0xff]
  %v958 = vld [vmem:[%s3 + $0x78] sm:$0xff]
  %v959 = vld [vmem:[%s3 + $0x80] sm:$0xff]
  %v960 = vld [vmem:[%s3 + $0x88] sm:$0xff]
  %v961 = vld [vmem:[%s3 + $0x90] sm:$0xff]
  %v962 = vld [vmem:[%s3 + $0x98] sm:$0xff]
  %v963 = vld [vmem:[%s3 + $0xa0] sm:$0xff]
  %vm964 = vcmask 326656
  %v966 = vsel %vm964, %v936, 0
  %v969 = vsel %vm964, %v938, 0
  %v972 = vsel %vm964, %v940, 0
  %v975 = vsel %vm964, %v942, 0
  %977 = vmatpush.msra.mxu0 %v958
  %978 = vmatpush.msra.mxu0 %v957
  %979 = vmatpush.msra.mxu0 %v956
  %980 = vmatpush.msra.mxu0 %v955
  %981 = vmatpush.msra.mxu0 %v954
  %982 = vmatpush.msra.mxu0 %v953
  %983 = vmatpush.msra.mxu0 %v952
  %984 = vmatpush.msra.mxu0 %v951
  %985 = vmatpush.msra.mxu0 %v950
  %986 = vmatpush.msra.mxu0 %v949
  %987 = vmatpush.msra.mxu0 %v948
  %988 = vmatpush.msra.mxu0 %v947
  %989 = vmatpush.msra.mxu0 %v946
  %990 = vmatpush.msra.mxu0 %v945
  %991 = vmatpush.msra.mxu0 %v944
  %992 = vmatpush.msra.mxu0 %v943
  %993 = vmatmul.f32.gmra.mxu0 %v935
  %v994 = vpop.f32.mrf.mxu0
  %v995 = vadd.f32 0.0, %v994
  %996 = vmatmul.f32.gmra.mxu0 %v937
  %v997 = vpop.f32.mrf.mxu0
  %v998 = vadd.f32 0.0, %v997
  %999 = vmatmul.f32.gmra.mxu0 %v939
  %v1000 = vpop.f32.mrf.mxu0
  %v1001 = vadd.f32 0.0, %v1000
  %1002 = vmatmul.f32.gmra.mxu0 %v941
  %v1003 = vpop.f32.mrf.mxu0
  %v1004 = vadd.f32 0.0, %v1003
  %1005 = vdwg.mxu0
  %1006 = vmatpush.msra.mxu0 0.0
  %1007 = vmatpush.msra.mxu0 0.0
  %1008 = vmatpush.msra.mxu0 0.0
  %1009 = vmatpush.msra.mxu0 0.0
  %1010 = vmatpush.msra.mxu0 0.0
  %1011 = vmatpush.msra.mxu0 0.0
  %1012 = vmatpush.msra.mxu0 0.0
  %1013 = vmatpush.msra.mxu0 0.0
  %1014 = vmatpush.msra.mxu0 0.0
  %1015 = vmatpush.msra.mxu0 0.0
  %1016 = vmatpush.msra.mxu0 0.0
  %1017 = vmatpush.msra.mxu0 %v963
  %1018 = vmatpush.msra.mxu0 %v962
  %1019 = vmatpush.msra.mxu0 %v961
  %1020 = vmatpush.msra.mxu0 %v960
  %1021 = vmatpush.msra.mxu0 %v959
  %1022 = vmatmul.f32.gmra.mxu0 %v966
  %v1023 = vpop.f32.mrf.mxu0
  %v1024 = vadd.f32 %v995, %v1023
  %1025 = vmatmul.f32.gmra.mxu0 %v969
  %v1026 = vpop.f32.mrf.mxu0
  %v1027 = vadd.f32 %v998, %v1026
  %1028 = vmatmul.f32.gmra.mxu0 %v972
  %v1029 = vpop.f32.mrf.mxu0
  %v1030 = vadd.f32 %v1001, %v1029
  %1031 = vmatmul.f32.gmra.mxu0 %v975
  %v1032 = vpop.f32.mrf.mxu0
  %v1033 = vadd.f32 %v1004, %v1032
  %1034 = vdwg.mxu0
  %vm1035 = vcmask 687104
  %1036 = vst.msk [vmem:[%s4] sm:$0xff] %vm1035, %v1024
  %1037 = vst.msk [vmem:[%s4 + $0x8] sm:$0xff] %vm1035, %v1027
  %1038 = vst.msk [vmem:[%s4 + $0x10] sm:$0xff] %vm1035, %v1030
  %vm1039 = vcmask 685056
  %1040 = vst.msk [vmem:[%s4 + $0x18] sm:$0x3f] %vm1039, %v1033
  %vm1041 = vcmask 680960
  %1042 = vst.msk [vmem:[%s4 + $0x1e] sm:$0x3] %vm1041, 0.0
  // Predicated region
  $region18: #{gm_images_net_forward.3} parent=0 // pred_check
    _
  $region19: #{gm_images_net_forward.3} parent=0 // pred_check_branch
    %1044 = sbr.rel (0) target = $region21
  $region20: #{gm_images_net_forward.3} parent=0 // pred_region
    _
  $region21: #{gm_images_net_forward.3} parent=0 // pred_fallthru
    _
  // Predicated region
  $region22: #{gm_images_net_forward.3} parent=0 // pred_check
    _
  $region23: #{gm_images_net_forward.3} parent=0 // pred_check_branch
    %1046 = sbr.rel (0) target = $region25
  $region24: #{gm_images_net_forward.3} parent=0 // pred_region
    _
  $region25: #{gm_images_net_forward.3} parent=0 // pred_fallthru
    _

</llo_original>
